<compile_context>
chip_gen: v6e
topology: v6e:2x2x1
jax: 0.10.0
libtpu: 0.0.40
codegen_flags: <defaults>
</compile_context>

<pallas_src>
import functools

import jax
import jax.numpy as jnp
from jax.experimental import pallas as pl
from jax.experimental.pallas import tpu as pltpu

LANE = 128  # TPU lane width; fused-head output padded to this for dense stores.


def actor_critic_kernel(x_ref, w1_ref, b1_ref, w2_ref, b2_ref, wh_ref, bh_ref,
                        out_ref, *, n_actions):
    x = x_ref[...]

    # fc1 + ReLU
    h1 = jnp.dot(x, w1_ref[...], preferred_element_type=jnp.float32,
                 precision=jax.lax.Precision.HIGHEST) + b1_ref[...]
    h1 = jnp.maximum(h1, 0.0)

    # fc2 + ReLU
    h2 = jnp.dot(h1, w2_ref[...], preferred_element_type=jnp.float32,
                 precision=jax.lax.Precision.HIGHEST) + b2_ref[...]
    h2 = jnp.maximum(h2, 0.0)

    # fused head: lanes [0, n_actions) = pi logits, lane n_actions = v, rest = pad
    logits = jnp.dot(h2, wh_ref[...], preferred_element_type=jnp.float32,
                     precision=jax.lax.Precision.HIGHEST) + bh_ref[...]

    lane = jax.lax.broadcasted_iota(jnp.int32, logits.shape, dimension=1)
    pi_mask = lane < n_actions
    v_mask = lane == n_actions

    # numerically-stable softmax over the pi lanes only (exact divide: cheap here)
    masked = jnp.where(pi_mask, logits, jnp.float32(-1e30))
    m = jnp.max(masked, axis=-1, keepdims=True)
    e = jnp.exp(masked - m)                         # padded / v lanes -> 0
    denom = jnp.sum(e, axis=-1, keepdims=True)
    pi = e / denom

    # pi in first n_actions lanes, v logit in lane n_actions, explicit 0 elsewhere
    fused = jnp.where(pi_mask, pi, jnp.where(v_mask, logits, 0.0))
    out_ref[...] = fused.astype(out_ref.dtype)


def _round_up(x, m):
    return (x + m - 1) // m * m


def prepare_fused_params(params):
    """Build the lane-dense fused pi/v head ONCE per parameter update.

    Returns (fused_params, n_actions).  Do NOT call this per forward step.
    """
    fc2, n_actions = params["w_pi"].shape
    w_head = jnp.zeros((fc2, LANE), jnp.float32)
    w_head = w_head.at[:, :n_actions].set(params["w_pi"])
    w_head = w_head.at[:, n_actions:n_actions + 1].set(params["w_v"])
    b_head = jnp.zeros((1, LANE), jnp.float32)
    b_head = b_head.at[:, :n_actions].set(params["b_pi"])
    b_head = b_head.at[:, n_actions:n_actions + 1].set(params["b_v"])
    fused = {"w1": params["w1"], "b1": params["b1"],
             "w2": params["w2"], "b2": params["b2"],
             "w_head": w_head, "b_head": b_head}
    return fused, int(n_actions)


@functools.partial(jax.jit, static_argnames=("n_actions", "tile_b", "out_dtype"))
def actor_critic_forward(state, fp, *, n_actions, tile_b=2048,
                         out_dtype=jnp.bfloat16):
    """Fused actor-critic forward pass.  Returns (pi [B, A], v [B, 1]) in f32."""
    B, d_in = state.shape
    fc1 = fp["w1"].shape[1]
    fc2 = fp["w2"].shape[1]

    # Batch tiling: sublane multiple matched to output dtype packing, capped at
    # tile_b, and small enough to give >=2 grid steps (megacore on v7x) when B
    # allows it.  No padding of `state`: Pallas clips the ragged last block.
    sub = max(8, 32 // jnp.dtype(out_dtype).itemsize)
    tb = min(_round_up(tile_b, sub), _round_up(pl.cdiv(B, 2), sub))
    tb = max(sub, tb)
    grid = (pl.cdiv(B, tb),)

    out = pl.pallas_call(
        functools.partial(actor_critic_kernel, n_actions=n_actions),
        out_shape=jax.ShapeDtypeStruct((B, LANE), out_dtype),
        grid=grid,
        in_specs=[
            pl.BlockSpec((tb, d_in), lambda i: (i, 0)),     # state: batch-tiled
            pl.BlockSpec((d_in, fc1), lambda i: (0, 0)),    # w1: VMEM-resident
            pl.BlockSpec((1, fc1), lambda i: (0, 0)),       # b1
            pl.BlockSpec((fc1, fc2), lambda i: (0, 0)),     # w2
            pl.BlockSpec((1, fc2), lambda i: (0, 0)),       # b2
            pl.BlockSpec((fc2, LANE), lambda i: (0, 0)),    # fused head W
            pl.BlockSpec((1, LANE), lambda i: (0, 0)),      # fused head b
        ],
        out_specs=pl.BlockSpec((tb, LANE), lambda i: (i, 0)),
        compiler_params=pltpu.CompilerParams(
            dimension_semantics=("parallel",)),
    )(state, fp["w1"], fp["b1"], fp["w2"], fp["b2"], fp["w_head"], fp["b_head"])

    pi = out[:, :n_actions].astype(jnp.float32)
    v = out[:, n_actions:n_actions + 1].astype(jnp.float32)
    return pi, v


def init_params(key, input_dims, fc1_dims, fc2_dims, n_actions):
    """Deterministic init mimicking nn.Linear's U(-1/sqrt(fan_in), 1/sqrt(fan_in))."""
    def linear(key, fan_in, fan_out):
        kw, kb = jax.random.split(key)
        bound = 1.0 / jnp.sqrt(jnp.asarray(fan_in, jnp.float32))
        w = jax.random.uniform(kw, (fan_in, fan_out), jnp.float32, -bound, bound)
        b = jax.random.uniform(kb, (1, fan_out), jnp.float32, -bound, bound)
        return w, b

    k1, k2, k3, k4 = jax.random.split(key, 4)
    w1, b1 = linear(k1, input_dims, fc1_dims)
    w2, b2 = linear(k2, fc1_dims, fc2_dims)
    w_pi, b_pi = linear(k3, fc2_dims, n_actions)
    w_v, b_v = linear(k4, fc2_dims, 1)
    return {"w1": w1, "b1": b1, "w2": w2, "b2": b2,
            "w_pi": w_pi, "b_pi": b_pi, "w_v": w_v, "b_v": b_v}


def reference_forward(state, p):
    h1 = jnp.maximum(state @ p["w1"] + p["b1"], 0.0)
    h2 = jnp.maximum(h1 @ p["w2"] + p["b2"], 0.0)
    pi = jax.nn.softmax(h2 @ p["w_pi"] + p["b_pi"], axis=-1)
    v = h2 @ p["w_v"] + p["b_v"]
    return pi, v


# TODO(synk): Adam optimizer / training step from the PyTorch module is not part of
# the forward pass and is not implemented here.

if __name__ == "__main__":
    # Shapes consistent with the module: input_dims=(8,), fc1=32, fc2=32,
    # n_actions=4, batch=8.
    B, D_IN, FC1, FC2, N_ACT = 8, 8, 32, 32, 4

    key = jax.random.PRNGKey(0)
    k_state, k_params = jax.random.split(key)
    state = jax.random.normal(k_state, (B, D_IN), jnp.float32)
    params = init_params(k_params, D_IN, FC1, FC2, N_ACT)

    # Fused head built once per parameter update (hoisted out of the forward).
    fused, n_actions = prepare_fused_params(params)

    pi, v = actor_critic_forward(state, fused, n_actions=n_actions)
    jax.block_until_ready((pi, v))

    pi_ref, v_ref = reference_forward(state, params)
    assert pi.shape == (B, N_ACT) and v.shape == (B, 1)
    # default out_dtype is bf16 (halves the dominant HBM writeback) -> looser tol.
    assert jnp.allclose(pi, pi_ref, atol=1e-2, rtol=1e-2)
    assert jnp.allclose(v, v_ref, atol=1e-2, rtol=1e-2)
    assert jnp.allclose(jnp.sum(pi, axis=-1), 1.0, atol=1e-2)

    # Exact f32 output path.
    pi32, v32 = actor_critic_forward(state, fused, n_actions=n_actions,
                                     out_dtype=jnp.float32)
    jax.block_until_ready((pi32, v32))
    assert jnp.allclose(pi32, pi_ref, atol=1e-4, rtol=1e-4)
    assert jnp.allclose(v32, v_ref, atol=1e-4, rtol=1e-4)

    # Multi-tile grid + ragged (non-divisible) batch path, no wrapper padding.
    B2 = 300
    state2 = jax.random.normal(jax.random.PRNGKey(1), (B2, D_IN), jnp.float32)
    pi2, v2 = actor_critic_forward(state2, fused, n_actions=n_actions, tile_b=128)
    jax.block_until_ready((pi2, v2))
    pi2_ref, v2_ref = reference_forward(state2, params)
    assert pi2.shape == (B2, N_ACT) and v2.shape == (B2, 1)
    assert jnp.allclose(pi2, pi2_ref, atol=1e-2, rtol=1e-2)
    assert jnp.allclose(v2, v2_ref, atol=1e-2, rtol=1e-2)

    print("KERNEL_OK")
</pallas_src>

<mosaic_0001>
module attributes {stable_mosaic.version = 11 : i64} {
  func.func @actor_critic_kernel(%arg0: i32, %arg1: memref<16x8xf32, #tpu.memory_space<vmem>>, %arg2: memref<8x32xf32, #tpu.memory_space<vmem>>, %arg3: memref<1x32xf32, #tpu.memory_space<vmem>>, %arg4: memref<32x32xf32, #tpu.memory_space<vmem>>, %arg5: memref<1x32xf32, #tpu.memory_space<vmem>>, %arg6: memref<32x128xf32, #tpu.memory_space<vmem>>, %arg7: memref<1x128xf32, #tpu.memory_space<vmem>>, %arg8: memref<16x128xbf16, #tpu.memory_space<vmem>>) attributes {dimension_semantics = [#tpu.dimension_semantics<parallel>], iteration_bounds = array<i64: 1>, scalar_prefetch = 0 : i64, scratch_operands = 0 : i64, tpu.core_type = #tpu.core_type<tc>, window_params = [{transform_indices = @transform_0, window_bounds = array<i64: 16, 8>}, {pipeline_mode = #tpu.pipeline_mode<synchronous>, transform_indices = @transform_1, window_bounds = array<i64: 8, 32>}, {pipeline_mode = #tpu.pipeline_mode<synchronous>, transform_indices = @transform_2, window_bounds = array<i64: 1, 32>}, {pipeline_mode = #tpu.pipeline_mode<synchronous>, transform_indices = @transform_3, window_bounds = array<i64: 32, 32>}, {pipeline_mode = #tpu.pipeline_mode<synchronous>, transform_indices = @transform_4, window_bounds = array<i64: 1, 32>}, {pipeline_mode = #tpu.pipeline_mode<synchronous>, transform_indices = @transform_5, window_bounds = array<i64: 32, 128>}, {pipeline_mode = #tpu.pipeline_mode<synchronous>, transform_indices = @transform_6, window_bounds = array<i64: 1, 128>}, {transform_indices = @transform_7, window_bounds = array<i64: 16, 128>}]} {
    %c0 = arith.constant 0 : index
    %c0_0 = arith.constant 0 : index
    %0 = vector.load %arg1[%c0, %c0_0] : memref<16x8xf32, #tpu.memory_space<vmem>>, vector<16x8xf32>
    %c0_1 = arith.constant 0 : index
    %c0_2 = arith.constant 0 : index
    %1 = vector.load %arg2[%c0_1, %c0_2] : memref<8x32xf32, #tpu.memory_space<vmem>>, vector<8x32xf32>
    %cst = arith.constant dense<0.000000e+00> : vector<16x32xf32>
    %2 = tpu.matmul %0, %1, %cst {dimension_numbers = #tpu.dot_dimension_numbers<[1], [0], [0], [1], [0, 0, 1, 1], [], []>, precision = #tpu.contract_precision<fp32>} : vector<16x8xf32>, vector<8x32xf32>, vector<16x32xf32> -> vector<16x32xf32>
    %c0_3 = arith.constant 0 : index
    %c0_4 = arith.constant 0 : index
    %3 = vector.load %arg3[%c0_3, %c0_4] : memref<1x32xf32, #tpu.memory_space<vmem>>, vector<1x32xf32>
    %4 = vector.broadcast %3 : vector<1x32xf32> to vector<16x32xf32>
    %5 = arith.addf %2, %4 : vector<16x32xf32>
    %cst_5 = arith.constant 0.000000e+00 : f32
    %6 = vector.broadcast %cst_5 : f32 to vector<16x32xf32>
    %7 = arith.maximumf %5, %6 : vector<16x32xf32>
    %c0_6 = arith.constant 0 : index
    %c0_7 = arith.constant 0 : index
    %8 = vector.load %arg4[%c0_6, %c0_7] : memref<32x32xf32, #tpu.memory_space<vmem>>, vector<32x32xf32>
    %cst_8 = arith.constant dense<0.000000e+00> : vector<16x32xf32>
    %9 = tpu.matmul %7, %8, %cst_8 {dimension_numbers = #tpu.dot_dimension_numbers<[1], [0], [0], [1], [0, 0, 1, 1], [], []>, precision = #tpu.contract_precision<fp32>} : vector<16x32xf32>, vector<32x32xf32>, vector<16x32xf32> -> vector<16x32xf32>
    %c0_9 = arith.constant 0 : index
    %c0_10 = arith.constant 0 : index
    %10 = vector.load %arg5[%c0_9, %c0_10] : memref<1x32xf32, #tpu.memory_space<vmem>>, vector<1x32xf32>
    %11 = vector.broadcast %10 : vector<1x32xf32> to vector<16x32xf32>
    %12 = arith.addf %9, %11 : vector<16x32xf32>
    %cst_11 = arith.constant 0.000000e+00 : f32
    %13 = vector.broadcast %cst_11 : f32 to vector<16x32xf32>
    %14 = arith.maximumf %12, %13 : vector<16x32xf32>
    %c0_12 = arith.constant 0 : index
    %c0_13 = arith.constant 0 : index
    %15 = vector.load %arg6[%c0_12, %c0_13] : memref<32x128xf32, #tpu.memory_space<vmem>>, vector<32x128xf32>
    %cst_14 = arith.constant dense<0.000000e+00> : vector<16x128xf32>
    %16 = tpu.matmul %14, %15, %cst_14 {dimension_numbers = #tpu.dot_dimension_numbers<[1], [0], [0], [1], [0, 0, 1, 1], [], []>, precision = #tpu.contract_precision<fp32>} : vector<16x32xf32>, vector<32x128xf32>, vector<16x128xf32> -> vector<16x128xf32>
    %c0_15 = arith.constant 0 : index
    %c0_16 = arith.constant 0 : index
    %17 = vector.load %arg7[%c0_15, %c0_16] : memref<1x128xf32, #tpu.memory_space<vmem>>, vector<1x128xf32>
    %18 = vector.broadcast %17 : vector<1x128xf32> to vector<16x128xf32>
    %19 = arith.addf %16, %18 : vector<16x128xf32>
    %20 = tpu.iota {dimensions = array<i32: 1>} : vector<16x128xi32>
    %c4_i32 = arith.constant 4 : i32
    %21 = vector.broadcast %c4_i32 : i32 to vector<16x128xi32>
    %22 = arith.cmpi slt, %20, %21 : vector<16x128xi32>
    %c4_i32_17 = arith.constant 4 : i32
    %23 = vector.broadcast %c4_i32_17 : i32 to vector<16x128xi32>
    %24 = arith.cmpi eq, %20, %23 : vector<16x128xi32>
    %cst_18 = arith.constant -1.000000e+30 : f32
    %25 = vector.broadcast %cst_18 : f32 to vector<16x128xf32>
    %26 = arith.select %22, %19, %25 : vector<16x128xi1>, vector<16x128xf32>
    %cst_19 = arith.constant dense<0xFF800000> : vector<16xf32>
    %27 = vector.multi_reduction <maximumf>, %26, %cst_19 [1] : vector<16x128xf32> to vector<16xf32>
    %28 = vector.shape_cast %27 : vector<16xf32> to vector<16x1xf32>
    %29 = vector.broadcast %28 : vector<16x1xf32> to vector<16x128xf32>
    %30 = arith.subf %26, %29 : vector<16x128xf32>
    %31 = math.exp %30 : vector<16x128xf32>
    %cst_20 = arith.constant dense<0.000000e+00> : vector<16xf32>
    %32 = vector.multi_reduction <add>, %31, %cst_20 [1] : vector<16x128xf32> to vector<16xf32>
    %33 = vector.shape_cast %32 : vector<16xf32> to vector<16x1xf32>
    %34 = vector.broadcast %33 : vector<16x1xf32> to vector<16x128xf32>
    %35 = arith.divf %31, %34 : vector<16x128xf32>
    %cst_21 = arith.constant 0.000000e+00 : f32
    %36 = vector.broadcast %cst_21 : f32 to vector<16x128xf32>
    %37 = arith.select %24, %19, %36 : vector<16x128xi1>, vector<16x128xf32>
    %38 = arith.select %22, %35, %37 : vector<16x128xi1>, vector<16x128xf32>
    %39 = arith.truncf %38 : vector<16x128xf32> to vector<16x128xbf16>
    %c0_22 = arith.constant 0 : index
    %c0_23 = arith.constant 0 : index
    %40 = vector.load %arg8[%c0_22, %c0_23] : memref<16x128xbf16, #tpu.memory_space<vmem>>, vector<16x128xbf16>
    tpu.vector_store %arg8[%c0_22, %c0_23], %39 {strides = array<i32>} : memref<16x128xbf16, #tpu.memory_space<vmem>>, vector<16x128xbf16>,
    return
  }
  func.func @transform_0(%arg0: i32) -> (i32, i32) {
    %c0_i32 = arith.constant 0 : i32
    %c0_i32_0 = arith.constant 0 : i32
    return %arg0, %c0_i32 : i32, i32
  }
  func.func @transform_1(%arg0: i32) -> (i32, i32) {
    %c0_i32 = arith.constant 0 : i32
    %c0_i32_0 = arith.constant 0 : i32
    %c0_i32_1 = arith.constant 0 : i32
    return %c0_i32, %c0_i32_0 : i32, i32
  }
  func.func @transform_2(%arg0: i32) -> (i32, i32) {
    %c0_i32 = arith.constant 0 : i32
    %c0_i32_0 = arith.constant 0 : i32
    %c0_i32_1 = arith.constant 0 : i32
    return %c0_i32, %c0_i32_0 : i32, i32
  }
  func.func @transform_3(%arg0: i32) -> (i32, i32) {
    %c0_i32 = arith.constant 0 : i32
    %c0_i32_0 = arith.constant 0 : i32
    %c0_i32_1 = arith.constant 0 : i32
    return %c0_i32, %c0_i32_0 : i32, i32
  }
  func.func @transform_4(%arg0: i32) -> (i32, i32) {
    %c0_i32 = arith.constant 0 : i32
    %c0_i32_0 = arith.constant 0 : i32
    %c0_i32_1 = arith.constant 0 : i32
    return %c0_i32, %c0_i32_0 : i32, i32
  }
  func.func @transform_5(%arg0: i32) -> (i32, i32) {
    %c0_i32 = arith.constant 0 : i32
    %c0_i32_0 = arith.constant 0 : i32
    %c0_i32_1 = arith.constant 0 : i32
    return %c0_i32, %c0_i32_0 : i32, i32
  }
  func.func @transform_6(%arg0: i32) -> (i32, i32) {
    %c0_i32 = arith.constant 0 : i32
    %c0_i32_0 = arith.constant 0 : i32
    %c0_i32_1 = arith.constant 0 : i32
    return %c0_i32, %c0_i32_0 : i32, i32
  }
  func.func @transform_7(%arg0: i32) -> (i32, i32) {
    %c0_i32 = arith.constant 0 : i32
    %c0_i32_0 = arith.constant 0 : i32
    return %arg0, %c0_i32 : i32, i32
  }
}

</mosaic_0001>

<llo_original>
// kernel: actor_critic_forward.1
$region0: #{actor_critic_forward.1}
  #allocation0 [shape = 'u32[]', space=smem, size = 0x4, offset = 0x4, fixed_abs, tag = 'smem constant byte address 0x4 - core index']
  #allocation1 [shape = 'u32[144,128]{1,0:T(1,128)}', space=vmem, size = 0x12000, scoped, tag = 'internal scratch']
  %s0 = inlined_call_operand.hbm [shape: f32[8,8], index: 0, kind: input, shape index: {}]
  %s1 = inlined_call_operand.hbm [shape: f32[8,32], index: 1, kind: input, shape index: {}]
  %s2 = inlined_call_operand.vmem [shape: f32[1,32], index: 2, kind: input, shape index: {}]
  %s3 = inlined_call_operand.hbm [shape: f32[32,32], index: 3, kind: input, shape index: {}]
  %s4 = inlined_call_operand.vmem [shape: f32[1,32], index: 4, kind: input, shape index: {}]
  %s5 = inlined_call_operand.hbm [shape: f32[32,128], index: 5, kind: input, shape index: {}]
  %s6 = inlined_call_operand.vmem [shape: f32[1,128], index: 6, kind: input, shape index: {}]
  %s7 = inlined_call_operand.vmem [shape: bf16[8,128], index: 7, kind: output, shape index: {}]
  %s8 = sld [smem:[#allocation0]]
  $region84: #{actor_critic_forward.1} parent=0
    _
  %s10 = ssub.s32 1, %s8
  %s11 = scalar_select 0, %s10, %s8
  $region1: #{actor_critic_forward.1} parent=0
    #allocation2 [shape = 'u8[8192]{0}', space=vmem, size = 0x2000, scoped, tag = 'input window, operand 0, single buffered']
    #allocation3 [shape = 's32[1]{0}', space=sflag, size = 0x4, scoped, tag = 'scoped memory for actor_critic_forward.1']
    #allocation4 [shape = 'u8[4096]{0}', space=vmem, size = 0x1000, scoped, tag = 'input window, operand 1, single buffered']
    #allocation5 [shape = 's32[1]{0}', space=sflag, size = 0x4, scoped, tag = 'scoped memory for actor_critic_forward.1']
    #allocation6 [shape = 'u8[16384]{0}', space=vmem, size = 0x4000, scoped, tag = 'input window, operand 3, single buffered']
    #allocation7 [shape = 'u8[16384]{0}', space=vmem, size = 0x4000, scoped, tag = 'input window, operand 5, single buffered']
    #allocation8 [shape = 's32[1]{0}', space=sflag, size = 0x4, scoped, tag = 'scoped memory for actor_critic_forward.1']
    #allocation9 [shape = 'u8[4096]{0}', space=vmem, size = 0x1000, scoped, tag = 'output window, operand 0, single buffered']
    %12 = vsyncpa [#allocation3], 0
    %13 = vsyncpa [#allocation5], 0
    %14 = vsyncpa [#allocation8], 0
    // Predicated region
    $region2: #{actor_critic_forward.1} parent=1 // pred_check
      _
    $region3: #{actor_critic_forward.1} parent=1 // pred_check_branch
      %16 = sbr.rel (0) target = $region5
    $region4: #{actor_critic_forward.1} parent=1 // pred_region
      %s18 = ssub.s32 256, 128
      %19 = vsyncadd [#allocation3], %s18
      %s20 = sshll.u32 [#allocation2], 4
      %s21 = int_to_ptr.vmem [resolvable:$true] %s20
      %26 = dma.hbm_to_vmem [thread:$0]  %s0, 128, %s21, [#allocation3], 128, 128, 8
    $region5: #{actor_critic_forward.1} parent=1 // pred_fallthru
      _
    // Predicated region
    $region6: #{actor_critic_forward.1} parent=1 // pred_check
      _
    $region7: #{actor_critic_forward.1} parent=1 // pred_check_branch
      %28 = sbr.rel (0) target = $region9
    $region8: #{actor_critic_forward.1} parent=1 // pred_region
      %s30 = ssub.s32 128, 128
      %31 = vsyncadd [#allocation5], %s30
      %s33 = sshll.u32 [#allocation4], 4
      %s34 = int_to_ptr.vmem [resolvable:$true] %s33
      %36 = dma.hbm_to_vmem [thread:$0]  %s1, 128, %s34, [#allocation5]
    $region9: #{actor_critic_forward.1} parent=1 // pred_fallthru
      _
    // Predicated region
    $region10: #{actor_critic_forward.1} parent=1 // pred_check
      _
    $region11: #{actor_critic_forward.1} parent=1 // pred_check_branch
      %38 = sbr.rel (0) target = $region13
    $region12: #{actor_critic_forward.1} parent=1 // pred_region
      _
    $region13: #{actor_critic_forward.1} parent=1 // pred_fallthru
      _
    // Predicated region
    $region14: #{actor_critic_forward.1} parent=1 // pred_check
      _
    $region15: #{actor_critic_forward.1} parent=1 // pred_check_branch
      %40 = sbr.rel (0) target = $region17
    $region16: #{actor_critic_forward.1} parent=1 // pred_region
      %s42 = ssub.s32 512, 512
      %43 = vsyncadd [#allocation5], %s42
      %s44 = sshll.u32 [#allocation6], 4
      %s45 = int_to_ptr.vmem [resolvable:$true] %s44
      %50 = dma.hbm_to_vmem [thread:$0]  %s3, 512, %s45, [#allocation5], 128, 128, 8
    $region17: #{actor_critic_forward.1} parent=1 // pred_fallthru
      _
    // Predicated region
    $region18: #{actor_critic_forward.1} parent=1 // pred_check
      _
    $region19: #{actor_critic_forward.1} parent=1 // pred_check_branch
      %52 = sbr.rel (0) target = $region21
    $region20: #{actor_critic_forward.1} parent=1 // pred_region
      _
    $region21: #{actor_critic_forward.1} parent=1 // pred_fallthru
      _
    // Predicated region
    $region22: #{actor_critic_forward.1} parent=1 // pred_check
      _
    $region23: #{actor_critic_forward.1} parent=1 // pred_check_branch
      %54 = sbr.rel (0) target = $region25
    $region24: #{actor_critic_forward.1} parent=1 // pred_region
      %s56 = ssub.s32 512, 512
      %57 = vsyncadd [#allocation8], %s56
      %s58 = sshll.u32 [#allocation7], 4
      %s59 = int_to_ptr.vmem [resolvable:$true] %s58
      %64 = dma.hbm_to_vmem [thread:$0]  %s5, 512, %s59, [#allocation8], 128, 128, 8
    $region25: #{actor_critic_forward.1} parent=1 // pred_fallthru
      _
    // Predicated region
    $region26: #{actor_critic_forward.1} parent=1 // pred_check
      _
    $region27: #{actor_critic_forward.1} parent=1 // pred_check_branch
      %66 = sbr.rel (0) target = $region29
    $region28: #{actor_critic_forward.1} parent=1 // pred_region
      _
    $region29: #{actor_critic_forward.1} parent=1 // pred_fallthru
      _
    // Predicated region
    $region30: #{actor_critic_forward.1} parent=1 // pred_check
      _
    $region31: #{actor_critic_forward.1} parent=1 // pred_check_branch
      %68 = sbr.rel (0) target = $region33
    $region32: #{actor_critic_forward.1} parent=1 // pred_region
      %69 = dma.done [#allocation3], 256
    $region33: #{actor_critic_forward.1} parent=1 // pred_fallthru
      _
    // Predicated region
    $region34: #{actor_critic_forward.1} parent=1 // pred_check
      _
    $region35: #{actor_critic_forward.1} parent=1 // pred_check_branch
      %71 = sbr.rel (0) target = $region37
    $region36: #{actor_critic_forward.1} parent=1 // pred_region
      %72 = dma.done [#allocation5], 128
    $region37: #{actor_critic_forward.1} parent=1 // pred_fallthru
      _
    // Predicated region
    $region38: #{actor_critic_forward.1} parent=1 // pred_check
      _
    $region39: #{actor_critic_forward.1} parent=1 // pred_check_branch
      %74 = sbr.rel (0) target = $region41
    $region40: #{actor_critic_forward.1} parent=1 // pred_region
      %75 = dma.done [#allocation5], 512
    $region41: #{actor_critic_forward.1} parent=1 // pred_fallthru
      _
    // Predicated region
    $region42: #{actor_critic_forward.1} parent=1 // pred_check
      _
    $region43: #{actor_critic_forward.1} parent=1 // pred_check_branch
      %77 = sbr.rel (0) target = $region45
    $region44: #{actor_critic_forward.1} parent=1 // pred_region
      %78 = dma.done [#allocation8], 512
    $region45: #{actor_critic_forward.1} parent=1 // pred_fallthru
      _
    %v79 = vld [vmem:[#allocation2] sm:$0xff]
    %v80 = vld [vmem:[#allocation2 + $0x8] sm:$0xff]
    %v81 = vld [vmem:[#allocation4] sm:$0xff]
    %v82 = vld [vmem:[%s2] sm:$0x1]
    %v84 = vlaneseq
    %v85 = vshrl.u32 %v84, 7
    %v86 = vsub.s32 0, %v85
    %v87 = vrot.slane %v82, %v86
    %vm89 = vcmask 64512
    %v91 = vsel %vm89, %v79, 0
    %v94 = vsel %vm89, %v80, 0
    %96 = vmatprep.subr.mxu0 0.0
    %97 = vmatpush1.msra.mxu0 0.0
    %98 = vmatprep.subr.mxu0 0.0
    %99 = vmatpush1.msra.mxu0 0.0
    %100 = vmatprep.subr.mxu0 0.0
    %101 = vmatpush1.msra.mxu0 0.0
    %102 = vmatprep.subr.mxu0 0.0
    %103 = vmatpush1.msra.mxu0 0.0
    %104 = vmatprep.subr.mxu0 0.0
    %105 = vmatpush1.msra.mxu0 0.0
    %106 = vmatprep.subr.mxu0 0.0
    %107 = vmatpush1.msra.mxu0 0.0
    %108 = vmatprep.subr.mxu0 0.0
    %109 = vmatpush1.msra.mxu0 0.0
    %110 = vmatprep.subr.mxu0 0.0
    %111 = vmatpush1.msra.mxu0 0.0
    %112 = vmatprep.subr.mxu0 0.0
    %113 = vmatpush1.msra.mxu0 0.0
    %114 = vmatprep.subr.mxu0 0.0
    %115 = vmatpush1.msra.mxu0 0.0
    %116 = vmatprep.subr.mxu0 0.0
    %117 = vmatpush1.msra.mxu0 0.0
    %118 = vmatprep.subr.mxu0 0.0
    %119 = vmatpush1.msra.mxu0 0.0
    %120 = vmatprep.subr.mxu0 0.0
    %121 = vmatpush1.msra.mxu0 0.0
    %122 = vmatprep.subr.mxu0 0.0
    %123 = vmatpush1.msra.mxu0 0.0
    %124 = vmatprep.subr.mxu0 0.0
    %125 = vmatpush1.msra.mxu0 0.0
    %126 = vmatprep.subr.mxu0 0.0
    %v127 = vand.u32 %v81, 4294901760
    %128 = vmatpush1.msra.mxu0 %v127
    %129 = vmatprep.subr.mxu0 0.0
    %130 = vmatpush2.msra.mxu0 0.0
    %131 = vmatprep.subr.mxu0 0.0
    %132 = vmatpush2.msra.mxu0 0.0
    %133 = vmatprep.subr.mxu0 0.0
    %134 = vmatpush2.msra.mxu0 0.0
    %135 = vmatprep.subr.mxu0 0.0
    %136 = vmatpush2.msra.mxu0 0.0
    %137 = vmatprep.subr.mxu0 0.0
    %138 = vmatpush2.msra.mxu0 0.0
    %139 = vmatprep.subr.mxu0 0.0
    %140 = vmatpush2.msra.mxu0 0.0
    %141 = vmatprep.subr.mxu0 0.0
    %142 = vmatpush2.msra.mxu0 0.0
    %143 = vmatprep.subr.mxu0 0.0
    %144 = vmatpush2.msra.mxu0 0.0
    %145 = vmatprep.subr.mxu0 0.0
    %146 = vmatpush2.msra.mxu0 0.0
    %147 = vmatprep.subr.mxu0 0.0
    %148 = vmatpush2.msra.mxu0 0.0
    %149 = vmatprep.subr.mxu0 0.0
    %150 = vmatpush2.msra.mxu0 0.0
    %151 = vmatprep.subr.mxu0 0.0
    %152 = vmatpush2.msra.mxu0 0.0
    %153 = vmatprep.subr.mxu0 0.0
    %154 = vmatpush2.msra.mxu0 0.0
    %155 = vmatprep.subr.mxu0 0.0
    %156 = vmatpush2.msra.mxu0 0.0
    %157 = vmatprep.subr.mxu0 0.0
    %158 = vmatpush2.msra.mxu0 0.0
    %159 = vmatprep.subr.mxu0 0.0
    %160 = vmatpush2.msra.mxu0 0.0
    %161 = vmatprep.mubr.f32.mxu0 0.0
    %v162 = vand.u32 %v91, 4294901760
    %v163 = vsub.f32 %v91, %v162
    %v164 = vand.u32 %v163, 4294901760
    %v165 = vsub.f32 %v163, %v164
    %v166 = vand.u32 %v165, 4294901760
    %167 = vmatmul.mubr.f32.gmra.mxu0 %v166
    %v168 = vpop.f32.mrf.mxu0
    %v169 = vadd.f32 %v87, %v168
    %v170 = vpop.f32.mrf.mxu0
    %171 = vmatprep.mubr.f32.mxu0 0.0
    %v172 = vand.u32 %v94, 4294901760
    %v173 = vsub.f32 %v94, %v172
    %v174 = vand.u32 %v173, 4294901760
    %v175 = vsub.f32 %v173, %v174
    %v176 = vand.u32 %v175, 4294901760
    %177 = vmatmul.mubr.f32.gmra.mxu0 %v176
    %v178 = vpop.f32.mrf.mxu0
    %v179 = vadd.f32 %v87, %v178
    %v180 = vpop.f32.mrf.mxu0
    %181 = vdwg.mxu0
    %182 = vmatprep.subr.mxu0 0.0
    %183 = vmatpush1.msra.mxu0 0.0
    %184 = vmatprep.subr.mxu0 0.0
    %185 = vmatpush1.msra.mxu0 0.0
    %186 = vmatprep.subr.mxu0 0.0
    %187 = vmatpush1.msra.mxu0 0.0
    %188 = vmatprep.subr.mxu0 0.0
    %189 = vmatpush1.msra.mxu0 0.0
    %190 = vmatprep.subr.mxu0 0.0
    %191 = vmatpush1.msra.mxu0 0.0
    %192 = vmatprep.subr.mxu0 0.0
    %193 = vmatpush1.msra.mxu0 0.0
    %194 = vmatprep.subr.mxu0 0.0
    %195 = vmatpush1.msra.mxu0 0.0
    %196 = vmatprep.subr.mxu0 0.0
    %197 = vmatpush1.msra.mxu0 0.0
    %198 = vmatprep.subr.mxu0 0.0
    %199 = vmatpush1.msra.mxu0 0.0
    %200 = vmatprep.subr.mxu0 0.0
    %201 = vmatpush1.msra.mxu0 0.0
    %202 = vmatprep.subr.mxu0 0.0
    %203 = vmatpush1.msra.mxu0 0.0
    %204 = vmatprep.subr.mxu0 0.0
    %205 = vmatpush1.msra.mxu0 0.0
    %206 = vmatprep.subr.mxu0 0.0
    %207 = vmatpush1.msra.mxu0 0.0
    %208 = vmatprep.subr.mxu0 0.0
    %209 = vmatpush1.msra.mxu0 0.0
    %210 = vmatprep.subr.mxu0 0.0
    %211 = vmatpush1.msra.mxu0 0.0
    %212 = vmatprep.subr.mxu0 0.0
    %v213 = vand.u32 %v81, 4294901760
    %v214 = vsub.f32 %v81, %v213
    %v215 = vand.u32 %v214, 4294901760
    %v216 = vsub.f32 %v214, %v215
    %v217 = vand.u32 %v216, 4294901760
    %218 = vmatpush1.msra.mxu0 %v217
    %219 = vmatprep.subr.mxu0 0.0
    %220 = vmatpush2.msra.mxu0 0.0
    %221 = vmatprep.subr.mxu0 0.0
    %222 = vmatpush2.msra.mxu0 0.0
    %223 = vmatprep.subr.mxu0 0.0
    %224 = vmatpush2.msra.mxu0 0.0
    %225 = vmatprep.subr.mxu0 0.0
    %226 = vmatpush2.msra.mxu0 0.0
    %227 = vmatprep.subr.mxu0 0.0
    %228 = vmatpush2.msra.mxu0 0.0
    %229 = vmatprep.subr.mxu0 0.0
    %230 = vmatpush2.msra.mxu0 0.0
    %231 = vmatprep.subr.mxu0 0.0
    %232 = vmatpush2.msra.mxu0 0.0
    %233 = vmatprep.subr.mxu0 0.0
    %234 = vmatpush2.msra.mxu0 0.0
    %235 = vmatprep.subr.mxu0 0.0
    %236 = vmatpush2.msra.mxu0 0.0
    %237 = vmatprep.subr.mxu0 0.0
    %238 = vmatpush2.msra.mxu0 0.0
    %239 = vmatprep.subr.mxu0 0.0
    %240 = vmatpush2.msra.mxu0 0.0
    %241 = vmatprep.subr.mxu0 0.0
    %242 = vmatpush2.msra.mxu0 0.0
    %243 = vmatprep.subr.mxu0 0.0
    %244 = vmatpush2.msra.mxu0 0.0
    %245 = vmatprep.subr.mxu0 0.0
    %246 = vmatpush2.msra.mxu0 0.0
    %247 = vmatprep.subr.mxu0 0.0
    %248 = vmatpush2.msra.mxu0 0.0
    %249 = vmatprep.subr.mxu0 0.0
    %250 = vmatpush2.msra.mxu0 0.0
    %251 = vmatprep.mubr.f32.mxu0 0.0
    %v252 = vand.u32 %v91, 4294901760
    %253 = vmatmul.mubr.f32.gmra.mxu0 %v252
    %v254 = vpop.f32.mrf.mxu0
    %v255 = vadd.f32 %v169, %v254
    %v256 = vpop.f32.mrf.mxu0
    %257 = vmatprep.mubr.f32.mxu0 0.0
    %v258 = vand.u32 %v94, 4294901760
    %259 = vmatmul.mubr.f32.gmra.mxu0 %v258
    %v260 = vpop.f32.mrf.mxu0
    %v261 = vadd.f32 %v179, %v260
    %v262 = vpop.f32.mrf.mxu0
    %263 = vdwg.mxu0
    %264 = vmatprep.subr.mxu0 0.0
    %265 = vmatpush1.msra.mxu0 0.0
    %266 = vmatprep.subr.mxu0 0.0
    %267 = vmatpush1.msra.mxu0 0.0
    %268 = vmatprep.subr.mxu0 0.0
    %269 = vmatpush1.msra.mxu0 0.0
    %270 = vmatprep.subr.mxu0 0.0
    %271 = vmatpush1.msra.mxu0 0.0
    %272 = vmatprep.subr.mxu0 0.0
    %273 = vmatpush1.msra.mxu0 0.0
    %274 = vmatprep.subr.mxu0 0.0
    %275 = vmatpush1.msra.mxu0 0.0
    %276 = vmatprep.subr.mxu0 0.0
    %277 = vmatpush1.msra.mxu0 0.0
    %278 = vmatprep.subr.mxu0 0.0
    %279 = vmatpush1.msra.mxu0 0.0
    %280 = vmatprep.subr.mxu0 0.0
    %281 = vmatpush1.msra.mxu0 0.0
    %282 = vmatprep.subr.mxu0 0.0
    %283 = vmatpush1.msra.mxu0 0.0
    %284 = vmatprep.subr.mxu0 0.0
    %285 = vmatpush1.msra.mxu0 0.0
    %286 = vmatprep.subr.mxu0 0.0
    %287 = vmatpush1.msra.mxu0 0.0
    %288 = vmatprep.subr.mxu0 0.0
    %289 = vmatpush1.msra.mxu0 0.0
    %290 = vmatprep.subr.mxu0 0.0
    %291 = vmatpush1.msra.mxu0 0.0
    %292 = vmatprep.subr.mxu0 0.0
    %293 = vmatpush1.msra.mxu0 0.0
    %294 = vmatprep.subr.mxu0 0.0
    %v295 = vand.u32 %v81, 4294901760
    %v296 = vsub.f32 %v81, %v295
    %297 = vmatpush1.msra.mxu0 %v296
    %298 = vmatprep.subr.mxu0 0.0
    %299 = vmatpush2.msra.mxu0 0.0
    %300 = vmatprep.subr.mxu0 0.0
    %301 = vmatpush2.msra.mxu0 0.0
    %302 = vmatprep.subr.mxu0 0.0
    %303 = vmatpush2.msra.mxu0 0.0
    %304 = vmatprep.subr.mxu0 0.0
    %305 = vmatpush2.msra.mxu0 0.0
    %306 = vmatprep.subr.mxu0 0.0
    %307 = vmatpush2.msra.mxu0 0.0
    %308 = vmatprep.subr.mxu0 0.0
    %309 = vmatpush2.msra.mxu0 0.0
    %310 = vmatprep.subr.mxu0 0.0
    %311 = vmatpush2.msra.mxu0 0.0
    %312 = vmatprep.subr.mxu0 0.0
    %313 = vmatpush2.msra.mxu0 0.0
    %314 = vmatprep.subr.mxu0 0.0
    %315 = vmatpush2.msra.mxu0 0.0
    %316 = vmatprep.subr.mxu0 0.0
    %317 = vmatpush2.msra.mxu0 0.0
    %318 = vmatprep.subr.mxu0 0.0
    %319 = vmatpush2.msra.mxu0 0.0
    %320 = vmatprep.subr.mxu0 0.0
    %321 = vmatpush2.msra.mxu0 0.0
    %322 = vmatprep.subr.mxu0 0.0
    %323 = vmatpush2.msra.mxu0 0.0
    %324 = vmatprep.subr.mxu0 0.0
    %325 = vmatpush2.msra.mxu0 0.0
    %326 = vmatprep.subr.mxu0 0.0
    %327 = vmatpush2.msra.mxu0 0.0
    %328 = vmatprep.subr.mxu0 0.0
    %329 = vmatpush2.msra.mxu0 0.0
    %330 = vmatprep.mubr.f32.mxu0 0.0
    %v331 = vand.u32 %v91, 4294901760
    %v332 = vsub.f32 %v91, %v331
    %333 = vmatmul.mubr.f32.gmra.mxu0 %v332
    %v334 = vpop.f32.mrf.mxu0
    %v335 = vadd.f32 %v255, %v334
    %v336 = vpop.f32.mrf.mxu0
    %337 = vmatprep.mubr.f32.mxu0 0.0
    %v338 = vand.u32 %v94, 4294901760
    %v339 = vsub.f32 %v94, %v338
    %340 = vmatmul.mubr.f32.gmra.mxu0 %v339
    %v341 = vpop.f32.mrf.mxu0
    %v342 = vadd.f32 %v261, %v341
    %v343 = vpop.f32.mrf.mxu0
    %344 = vdwg.mxu0
    %345 = vmatprep.subr.mxu0 0.0
    %346 = vmatpush1.msra.mxu0 0.0
    %347 = vmatprep.subr.mxu0 0.0
    %348 = vmatpush1.msra.mxu0 0.0
    %349 = vmatprep.subr.mxu0 0.0
    %350 = vmatpush1.msra.mxu0 0.0
    %351 = vmatprep.subr.mxu0 0.0
    %352 = vmatpush1.msra.mxu0 0.0
    %353 = vmatprep.subr.mxu0 0.0
    %354 = vmatpush1.msra.mxu0 0.0
    %355 = vmatprep.subr.mxu0 0.0
    %356 = vmatpush1.msra.mxu0 0.0
    %357 = vmatprep.subr.mxu0 0.0
    %358 = vmatpush1.msra.mxu0 0.0
    %359 = vmatprep.subr.mxu0 0.0
    %360 = vmatpush1.msra.mxu0 0.0
    %361 = vmatprep.subr.mxu0 0.0
    %362 = vmatpush1.msra.mxu0 0.0
    %363 = vmatprep.subr.mxu0 0.0
    %364 = vmatpush1.msra.mxu0 0.0
    %365 = vmatprep.subr.mxu0 0.0
    %366 = vmatpush1.msra.mxu0 0.0
    %367 = vmatprep.subr.mxu0 0.0
    %368 = vmatpush1.msra.mxu0 0.0
    %369 = vmatprep.subr.mxu0 0.0
    %370 = vmatpush1.msra.mxu0 0.0
    %371 = vmatprep.subr.mxu0 0.0
    %372 = vmatpush1.msra.mxu0 0.0
    %373 = vmatprep.subr.mxu0 0.0
    %374 = vmatpush1.msra.mxu0 0.0
    %375 = vmatprep.subr.mxu0 0.0
    %v376 = vand.u32 %v81, 4294901760
    %377 = vmatpush1.msra.mxu0 %v376
    %378 = vmatprep.subr.mxu0 0.0
    %379 = vmatpush2.msra.mxu0 0.0
    %380 = vmatprep.subr.mxu0 0.0
    %381 = vmatpush2.msra.mxu0 0.0
    %382 = vmatprep.subr.mxu0 0.0
    %383 = vmatpush2.msra.mxu0 0.0
    %384 = vmatprep.subr.mxu0 0.0
    %385 = vmatpush2.msra.mxu0 0.0
    %386 = vmatprep.subr.mxu0 0.0
    %387 = vmatpush2.msra.mxu0 0.0
    %388 = vmatprep.subr.mxu0 0.0
    %389 = vmatpush2.msra.mxu0 0.0
    %390 = vmatprep.subr.mxu0 0.0
    %391 = vmatpush2.msra.mxu0 0.0
    %392 = vmatprep.subr.mxu0 0.0
    %393 = vmatpush2.msra.mxu0 0.0
    %394 = vmatprep.subr.mxu0 0.0
    %395 = vmatpush2.msra.mxu0 0.0
    %396 = vmatprep.subr.mxu0 0.0
    %397 = vmatpush2.msra.mxu0 0.0
    %398 = vmatprep.subr.mxu0 0.0
    %399 = vmatpush2.msra.mxu0 0.0
    %400 = vmatprep.subr.mxu0 0.0
    %401 = vmatpush2.msra.mxu0 0.0
    %402 = vmatprep.subr.mxu0 0.0
    %403 = vmatpush2.msra.mxu0 0.0
    %404 = vmatprep.subr.mxu0 0.0
    %405 = vmatpush2.msra.mxu0 0.0
    %406 = vmatprep.subr.mxu0 0.0
    %407 = vmatpush2.msra.mxu0 0.0
    %408 = vmatprep.subr.mxu0 0.0
    %409 = vmatpush2.msra.mxu0 0.0
    %410 = vmatprep.mubr.f32.mxu0 0.0
    %v411 = vand.u32 %v91, 4294901760
    %v412 = vsub.f32 %v91, %v411
    %v413 = vand.u32 %v412, 4294901760
    %414 = vmatmul.mubr.f32.gmra.mxu0 %v413
    %v415 = vpop.f32.mrf.mxu0
    %v416 = vadd.f32 %v335, %v415
    %v417 = vpop.f32.mrf.mxu0
    %418 = vmatprep.mubr.f32.mxu0 0.0
    %v419 = vand.u32 %v94, 4294901760
    %v420 = vsub.f32 %v94, %v419
    %v421 = vand.u32 %v420, 4294901760
    %422 = vmatmul.mubr.f32.gmra.mxu0 %v421
    %v423 = vpop.f32.mrf.mxu0
    %v424 = vadd.f32 %v342, %v423
    %v425 = vpop.f32.mrf.mxu0
    %426 = vdwg.mxu0
    %427 = vmatprep.subr.mxu0 0.0
    %428 = vmatpush1.msra.mxu0 0.0
    %429 = vmatprep.subr.mxu0 0.0
    %430 = vmatpush1.msra.mxu0 0.0
    %431 = vmatprep.subr.mxu0 0.0
    %432 = vmatpush1.msra.mxu0 0.0
    %433 = vmatprep.subr.mxu0 0.0
    %434 = vmatpush1.msra.mxu0 0.0
    %435 = vmatprep.subr.mxu0 0.0
    %436 = vmatpush1.msra.mxu0 0.0
    %437 = vmatprep.subr.mxu0 0.0
    %438 = vmatpush1.msra.mxu0 0.0
    %439 = vmatprep.subr.mxu0 0.0
    %440 = vmatpush1.msra.mxu0 0.0
    %441 = vmatprep.subr.mxu0 0.0
    %442 = vmatpush1.msra.mxu0 0.0
    %443 = vmatprep.subr.mxu0 0.0
    %444 = vmatpush1.msra.mxu0 0.0
    %445 = vmatprep.subr.mxu0 0.0
    %446 = vmatpush1.msra.mxu0 0.0
    %447 = vmatprep.subr.mxu0 0.0
    %448 = vmatpush1.msra.mxu0 0.0
    %449 = vmatprep.subr.mxu0 0.0
    %450 = vmatpush1.msra.mxu0 0.0
    %451 = vmatprep.subr.mxu0 0.0
    %452 = vmatpush1.msra.mxu0 0.0
    %453 = vmatprep.subr.mxu0 0.0
    %454 = vmatpush1.msra.mxu0 0.0
    %455 = vmatprep.subr.mxu0 0.0
    %456 = vmatpush1.msra.mxu0 0.0
    %457 = vmatprep.subr.mxu0 0.0
    %v458 = vand.u32 %v81, 4294901760
    %v459 = vsub.f32 %v81, %v458
    %v460 = vand.u32 %v459, 4294901760
    %461 = vmatpush1.msra.mxu0 %v460
    %462 = vmatprep.subr.mxu0 0.0
    %463 = vmatpush2.msra.mxu0 0.0
    %464 = vmatprep.subr.mxu0 0.0
    %465 = vmatpush2.msra.mxu0 0.0
    %466 = vmatprep.subr.mxu0 0.0
    %467 = vmatpush2.msra.mxu0 0.0
    %468 = vmatprep.subr.mxu0 0.0
    %469 = vmatpush2.msra.mxu0 0.0
    %470 = vmatprep.subr.mxu0 0.0
    %471 = vmatpush2.msra.mxu0 0.0
    %472 = vmatprep.subr.mxu0 0.0
    %473 = vmatpush2.msra.mxu0 0.0
    %474 = vmatprep.subr.mxu0 0.0
    %475 = vmatpush2.msra.mxu0 0.0
    %476 = vmatprep.subr.mxu0 0.0
    %477 = vmatpush2.msra.mxu0 0.0
    %478 = vmatprep.subr.mxu0 0.0
    %479 = vmatpush2.msra.mxu0 0.0
    %480 = vmatprep.subr.mxu0 0.0
    %481 = vmatpush2.msra.mxu0 0.0
    %482 = vmatprep.subr.mxu0 0.0
    %483 = vmatpush2.msra.mxu0 0.0
    %484 = vmatprep.subr.mxu0 0.0
    %485 = vmatpush2.msra.mxu0 0.0
    %486 = vmatprep.subr.mxu0 0.0
    %487 = vmatpush2.msra.mxu0 0.0
    %488 = vmatprep.subr.mxu0 0.0
    %489 = vmatpush2.msra.mxu0 0.0
    %490 = vmatprep.subr.mxu0 0.0
    %491 = vmatpush2.msra.mxu0 0.0
    %492 = vmatprep.subr.mxu0 0.0
    %493 = vmatpush2.msra.mxu0 0.0
    %494 = vmatprep.mubr.f32.mxu0 0.0
    %v495 = vand.u32 %v91, 4294901760
    %496 = vmatmul.mubr.f32.gmra.mxu0 %v495
    %v497 = vpop.f32.mrf.mxu0
    %v498 = vadd.f32 %v416, %v497
    %v499 = vpop.f32.mrf.mxu0
    %500 = vmatprep.mubr.f32.mxu0 0.0
    %v501 = vand.u32 %v94, 4294901760
    %502 = vmatmul.mubr.f32.gmra.mxu0 %v501
    %v503 = vpop.f32.mrf.mxu0
    %v504 = vadd.f32 %v424, %v503
    %v505 = vpop.f32.mrf.mxu0
    %506 = vdwg.mxu0
    %507 = vmatprep.subr.mxu0 0.0
    %508 = vmatpush1.msra.mxu0 0.0
    %509 = vmatprep.subr.mxu0 0.0
    %510 = vmatpush1.msra.mxu0 0.0
    %511 = vmatprep.subr.mxu0 0.0
    %512 = vmatpush1.msra.mxu0 0.0
    %513 = vmatprep.subr.mxu0 0.0
    %514 = vmatpush1.msra.mxu0 0.0
    %515 = vmatprep.subr.mxu0 0.0
    %516 = vmatpush1.msra.mxu0 0.0
    %517 = vmatprep.subr.mxu0 0.0
    %518 = vmatpush1.msra.mxu0 0.0
    %519 = vmatprep.subr.mxu0 0.0
    %520 = vmatpush1.msra.mxu0 0.0
    %521 = vmatprep.subr.mxu0 0.0
    %522 = vmatpush1.msra.mxu0 0.0
    %523 = vmatprep.subr.mxu0 0.0
    %524 = vmatpush1.msra.mxu0 0.0
    %525 = vmatprep.subr.mxu0 0.0
    %526 = vmatpush1.msra.mxu0 0.0
    %527 = vmatprep.subr.mxu0 0.0
    %528 = vmatpush1.msra.mxu0 0.0
    %529 = vmatprep.subr.mxu0 0.0
    %530 = vmatpush1.msra.mxu0 0.0
    %531 = vmatprep.subr.mxu0 0.0
    %532 = vmatpush1.msra.mxu0 0.0
    %533 = vmatprep.subr.mxu0 0.0
    %534 = vmatpush1.msra.mxu0 0.0
    %535 = vmatprep.subr.mxu0 0.0
    %536 = vmatpush1.msra.mxu0 0.0
    %537 = vmatprep.subr.mxu0 0.0
    %v538 = vand.u32 %v81, 4294901760
    %539 = vmatpush1.msra.mxu0 %v538
    %540 = vmatprep.subr.mxu0 0.0
    %541 = vmatpush2.msra.mxu0 0.0
    %542 = vmatprep.subr.mxu0 0.0
    %543 = vmatpush2.msra.mxu0 0.0
    %544 = vmatprep.subr.mxu0 0.0
    %545 = vmatpush2.msra.mxu0 0.0
    %546 = vmatprep.subr.mxu0 0.0
    %547 = vmatpush2.msra.mxu0 0.0
    %548 = vmatprep.subr.mxu0 0.0
    %549 = vmatpush2.msra.mxu0 0.0
    %550 = vmatprep.subr.mxu0 0.0
    %551 = vmatpush2.msra.mxu0 0.0
    %552 = vmatprep.subr.mxu0 0.0
    %553 = vmatpush2.msra.mxu0 0.0
    %554 = vmatprep.subr.mxu0 0.0
    %555 = vmatpush2.msra.mxu0 0.0
    %556 = vmatprep.subr.mxu0 0.0
    %557 = vmatpush2.msra.mxu0 0.0
    %558 = vmatprep.subr.mxu0 0.0
    %559 = vmatpush2.msra.mxu0 0.0
    %560 = vmatprep.subr.mxu0 0.0
    %561 = vmatpush2.msra.mxu0 0.0
    %562 = vmatprep.subr.mxu0 0.0
    %563 = vmatpush2.msra.mxu0 0.0
    %564 = vmatprep.subr.mxu0 0.0
    %565 = vmatpush2.msra.mxu0 0.0
    %566 = vmatprep.subr.mxu0 0.0
    %567 = vmatpush2.msra.mxu0 0.0
    %568 = vmatprep.subr.mxu0 0.0
    %569 = vmatpush2.msra.mxu0 0.0
    %570 = vmatprep.subr.mxu0 0.0
    %571 = vmatpush2.msra.mxu0 0.0
    %572 = vmatprep.mubr.f32.mxu0 0.0
    %v573 = vand.u32 %v91, 4294901760
    %574 = vmatmul.mubr.f32.gmra.mxu0 %v573
    %v575 = vpop.f32.mrf.mxu0
    %v576 = vadd.f32 %v498, %v575
    %v577 = vpop.f32.mrf.mxu0
    %578 = vmatprep.mubr.f32.mxu0 0.0
    %v579 = vand.u32 %v94, 4294901760
    %580 = vmatmul.mubr.f32.gmra.mxu0 %v579
    %v581 = vpop.f32.mrf.mxu0
    %v582 = vadd.f32 %v504, %v581
    %v583 = vpop.f32.mrf.mxu0
    %584 = vdwg.mxu0
    %v585 = vmax.f32 %v576, 0.0
    %v586 = vmax.f32 %v582, 0.0
    %v587 = vld [vmem:[#allocation6] sm:$0xff]
    %v588 = vld [vmem:[#allocation6 + $0x8] sm:$0xff]
    %v589 = vld [vmem:[#allocation6 + $0x10] sm:$0xff]
    %v590 = vld [vmem:[#allocation6 + $0x18] sm:$0xff]
    %v591 = vld [vmem:[%s4] sm:$0x1]
    %v593 = vlaneseq
    %v594 = vshrl.u32 %v593, 7
    %v595 = vsub.s32 0, %v594
    %v596 = vrot.slane %v591, %v595
    %vm598 = vcmask 261120
    %v600 = vsel %vm598, %v585, 0
    %v603 = vsel %vm598, %v586, 0
    %605 = vmatprep.subr.mxu0 0.0
    %606 = vmatpush1.msra.mxu0 0.0
    %607 = vmatprep.subr.mxu0 0.0
    %608 = vmatpush1.msra.mxu0 0.0
    %609 = vmatprep.subr.mxu0 0.0
    %610 = vmatpush1.msra.mxu0 0.0
    %611 = vmatprep.subr.mxu0 0.0
    %612 = vmatpush1.msra.mxu0 0.0
    %613 = vmatprep.subr.mxu0 0.0
    %614 = vmatpush1.msra.mxu0 0.0
    %615 = vmatprep.subr.mxu0 0.0
    %616 = vmatpush1.msra.mxu0 0.0
    %617 = vmatprep.subr.mxu0 0.0
    %618 = vmatpush1.msra.mxu0 0.0
    %619 = vmatprep.subr.mxu0 0.0
    %620 = vmatpush1.msra.mxu0 0.0
    %621 = vmatprep.subr.mxu0 0.0
    %622 = vmatpush1.msra.mxu0 0.0
    %623 = vmatprep.subr.mxu0 0.0
    %624 = vmatpush1.msra.mxu0 0.0
    %625 = vmatprep.subr.mxu0 0.0
    %626 = vmatpush1.msra.mxu0 0.0
    %627 = vmatprep.subr.mxu0 0.0
    %628 = vmatpush1.msra.mxu0 0.0
    %629 = vmatprep.subr.mxu0 0.0
    %v630 = vand.u32 %v590, 4294901760
    %631 = vmatpush1.msra.mxu0 %v630
    %632 = vmatprep.subr.mxu0 0.0
    %v633 = vand.u32 %v589, 4294901760
    %634 = vmatpush1.msra.mxu0 %v633
    %635 = vmatprep.subr.mxu0 0.0
    %v636 = vand.u32 %v588, 4294901760
    %637 = vmatpush1.msra.mxu0 %v636
    %638 = vmatprep.subr.mxu0 0.0
    %v639 = vand.u32 %v587, 4294901760
    %640 = vmatpush1.msra.mxu0 %v639
    %641 = vmatprep.subr.mxu0 0.0
    %642 = vmatpush2.msra.mxu0 0.0
    %643 = vmatprep.subr.mxu0 0.0
    %644 = vmatpush2.msra.mxu0 0.0
    %645 = vmatprep.subr.mxu0 0.0
    %646 = vmatpush2.msra.mxu0 0.0
    %647 = vmatprep.subr.mxu0 0.0
    %648 = vmatpush2.msra.mxu0 0.0
    %649 = vmatprep.subr.mxu0 0.0
    %650 = vmatpush2.msra.mxu0 0.0
    %651 = vmatprep.subr.mxu0 0.0
    %652 = vmatpush2.msra.mxu0 0.0
    %653 = vmatprep.subr.mxu0 0.0
    %654 = vmatpush2.msra.mxu0 0.0
    %655 = vmatprep.subr.mxu0 0.0
    %656 = vmatpush2.msra.mxu0 0.0
    %657 = vmatprep.subr.mxu0 0.0
    %658 = vmatpush2.msra.mxu0 0.0
    %659 = vmatprep.subr.mxu0 0.0
    %660 = vmatpush2.msra.mxu0 0.0
    %661 = vmatprep.subr.mxu0 0.0
    %662 = vmatpush2.msra.mxu0 0.0
    %663 = vmatprep.subr.mxu0 0.0
    %664 = vmatpush2.msra.mxu0 0.0
    %665 = vmatprep.subr.mxu0 0.0
    %666 = vmatpush2.msra.mxu0 0.0
    %667 = vmatprep.subr.mxu0 0.0
    %668 = vmatpush2.msra.mxu0 0.0
    %669 = vmatprep.subr.mxu0 0.0
    %670 = vmatpush2.msra.mxu0 0.0
    %671 = vmatprep.subr.mxu0 0.0
    %672 = vmatpush2.msra.mxu0 0.0
    %673 = vmatprep.mubr.f32.mxu0 0.0
    %v674 = vand.u32 %v600, 4294901760
    %v675 = vsub.f32 %v600, %v674
    %v676 = vand.u32 %v675, 4294901760
    %v677 = vsub.f32 %v675, %v676
    %v678 = vand.u32 %v677, 4294901760
    %679 = vmatmul.mubr.f32.gmra.mxu0 %v678
    %v680 = vpop.f32.mrf.mxu0
    %v681 = vadd.f32 %v596, %v680
    %v682 = vpop.f32.mrf.mxu0
    %683 = vmatprep.mubr.f32.mxu0 0.0
    %v684 = vand.u32 %v603, 4294901760
    %v685 = vsub.f32 %v603, %v684
    %v686 = vand.u32 %v685, 4294901760
    %v687 = vsub.f32 %v685, %v686
    %v688 = vand.u32 %v687, 4294901760
    %689 = vmatmul.mubr.f32.gmra.mxu0 %v688
    %v690 = vpop.f32.mrf.mxu0
    %v691 = vadd.f32 %v596, %v690
    %v692 = vpop.f32.mrf.mxu0
    %693 = vdwg.mxu0
    %694 = vmatprep.subr.mxu0 0.0
    %695 = vmatpush1.msra.mxu0 0.0
    %696 = vmatprep.subr.mxu0 0.0
    %697 = vmatpush1.msra.mxu0 0.0
    %698 = vmatprep.subr.mxu0 0.0
    %699 = vmatpush1.msra.mxu0 0.0
    %700 = vmatprep.subr.mxu0 0.0
    %701 = vmatpush1.msra.mxu0 0.0
    %702 = vmatprep.subr.mxu0 0.0
    %703 = vmatpush1.msra.mxu0 0.0
    %704 = vmatprep.subr.mxu0 0.0
    %705 = vmatpush1.msra.mxu0 0.0
    %706 = vmatprep.subr.mxu0 0.0
    %707 = vmatpush1.msra.mxu0 0.0
    %708 = vmatprep.subr.mxu0 0.0
    %709 = vmatpush1.msra.mxu0 0.0
    %710 = vmatprep.subr.mxu0 0.0
    %711 = vmatpush1.msra.mxu0 0.0
    %712 = vmatprep.subr.mxu0 0.0
    %713 = vmatpush1.msra.mxu0 0.0
    %714 = vmatprep.subr.mxu0 0.0
    %715 = vmatpush1.msra.mxu0 0.0
    %716 = vmatprep.subr.mxu0 0.0
    %717 = vmatpush1.msra.mxu0 0.0
    %718 = vmatprep.subr.mxu0 0.0
    %v719 = vand.u32 %v590, 4294901760
    %v720 = vsub.f32 %v590, %v719
    %v721 = vand.u32 %v720, 4294901760
    %v722 = vsub.f32 %v720, %v721
    %v723 = vand.u32 %v722, 4294901760
    %724 = vmatpush1.msra.mxu0 %v723
    %725 = vmatprep.subr.mxu0 0.0
    %v726 = vand.u32 %v589, 4294901760
    %v727 = vsub.f32 %v589, %v726
    %v728 = vand.u32 %v727, 4294901760
    %v729 = vsub.f32 %v727, %v728
    %v730 = vand.u32 %v729, 4294901760
    %731 = vmatpush1.msra.mxu0 %v730
    %732 = vmatprep.subr.mxu0 0.0
    %v733 = vand.u32 %v588, 4294901760
    %v734 = vsub.f32 %v588, %v733
    %v735 = vand.u32 %v734, 4294901760
    %v736 = vsub.f32 %v734, %v735
    %v737 = vand.u32 %v736, 4294901760
    %738 = vmatpush1.msra.mxu0 %v737
    %739 = vmatprep.subr.mxu0 0.0
    %v740 = vand.u32 %v587, 4294901760
    %v741 = vsub.f32 %v587, %v740
    %v742 = vand.u32 %v741, 4294901760
    %v743 = vsub.f32 %v741, %v742
    %v744 = vand.u32 %v743, 4294901760
    %745 = vmatpush1.msra.mxu0 %v744
    %746 = vmatprep.subr.mxu0 0.0
    %747 = vmatpush2.msra.mxu0 0.0
    %748 = vmatprep.subr.mxu0 0.0
    %749 = vmatpush2.msra.mxu0 0.0
    %750 = vmatprep.subr.mxu0 0.0
    %751 = vmatpush2.msra.mxu0 0.0
    %752 = vmatprep.subr.mxu0 0.0
    %753 = vmatpush2.msra.mxu0 0.0
    %754 = vmatprep.subr.mxu0 0.0
    %755 = vmatpush2.msra.mxu0 0.0
    %756 = vmatprep.subr.mxu0 0.0
    %757 = vmatpush2.msra.mxu0 0.0
    %758 = vmatprep.subr.mxu0 0.0
    %759 = vmatpush2.msra.mxu0 0.0
    %760 = vmatprep.subr.mxu0 0.0
    %761 = vmatpush2.msra.mxu0 0.0
    %762 = vmatprep.subr.mxu0 0.0
    %763 = vmatpush2.msra.mxu0 0.0
    %764 = vmatprep.subr.mxu0 0.0
    %765 = vmatpush2.msra.mxu0 0.0
    %766 = vmatprep.subr.mxu0 0.0
    %767 = vmatpush2.msra.mxu0 0.0
    %768 = vmatprep.subr.mxu0 0.0
    %769 = vmatpush2.msra.mxu0 0.0
    %770 = vmatprep.subr.mxu0 0.0
    %771 = vmatpush2.msra.mxu0 0.0
    %772 = vmatprep.subr.mxu0 0.0
    %773 = vmatpush2.msra.mxu0 0.0
    %774 = vmatprep.subr.mxu0 0.0
    %775 = vmatpush2.msra.mxu0 0.0
    %776 = vmatprep.subr.mxu0 0.0
    %777 = vmatpush2.msra.mxu0 0.0
    %778 = vmatprep.mubr.f32.mxu0 0.0
    %v779 = vand.u32 %v600, 4294901760
    %780 = vmatmul.mubr.f32.gmra.mxu0 %v779
    %v781 = vpop.f32.mrf.mxu0
    %v782 = vadd.f32 %v681, %v781
    %v783 = vpop.f32.mrf.mxu0
    %784 = vmatprep.mubr.f32.mxu0 0.0
    %v785 = vand.u32 %v603, 4294901760
    %786 = vmatmul.mubr.f32.gmra.mxu0 %v785
    %v787 = vpop.f32.mrf.mxu0
    %v788 = vadd.f32 %v691, %v787
    %v789 = vpop.f32.mrf.mxu0
    %790 = vdwg.mxu0
    %791 = vmatprep.subr.mxu0 0.0
    %792 = vmatpush1.msra.mxu0 0.0
    %793 = vmatprep.subr.mxu0 0.0
    %794 = vmatpush1.msra.mxu0 0.0
    %795 = vmatprep.subr.mxu0 0.0
    %796 = vmatpush1.msra.mxu0 0.0
    %797 = vmatprep.subr.mxu0 0.0
    %798 = vmatpush1.msra.mxu0 0.0
    %799 = vmatprep.subr.mxu0 0.0
    %800 = vmatpush1.msra.mxu0 0.0
    %801 = vmatprep.subr.mxu0 0.0
    %802 = vmatpush1.msra.mxu0 0.0
    %803 = vmatprep.subr.mxu0 0.0
    %804 = vmatpush1.msra.mxu0 0.0
    %805 = vmatprep.subr.mxu0 0.0
    %806 = vmatpush1.msra.mxu0 0.0
    %807 = vmatprep.subr.mxu0 0.0
    %808 = vmatpush1.msra.mxu0 0.0
    %809 = vmatprep.subr.mxu0 0.0
    %810 = vmatpush1.msra.mxu0 0.0
    %811 = vmatprep.subr.mxu0 0.0
    %812 = vmatpush1.msra.mxu0 0.0
    %813 = vmatprep.subr.mxu0 0.0
    %814 = vmatpush1.msra.mxu0 0.0
    %815 = vmatprep.subr.mxu0 0.0
    %v816 = vand.u32 %v590, 4294901760
    %v817 = vsub.f32 %v590, %v816
    %818 = vmatpush1.msra.mxu0 %v817
    %819 = vmatprep.subr.mxu0 0.0
    %v820 = vand.u32 %v589, 4294901760
    %v821 = vsub.f32 %v589, %v820
    %822 = vmatpush1.msra.mxu0 %v821
    %823 = vmatprep.subr.mxu0 0.0
    %v824 = vand.u32 %v588, 4294901760
    %v825 = vsub.f32 %v588, %v824
    %826 = vmatpush1.msra.mxu0 %v825
    %827 = vmatprep.subr.mxu0 0.0
    %v828 = vand.u32 %v587, 4294901760
    %v829 = vsub.f32 %v587, %v828
    %830 = vmatpush1.msra.mxu0 %v829
    %831 = vmatprep.subr.mxu0 0.0
    %832 = vmatpush2.msra.mxu0 0.0
    %833 = vmatprep.subr.mxu0 0.0
    %834 = vmatpush2.msra.mxu0 0.0
    %835 = vmatprep.subr.mxu0 0.0
    %836 = vmatpush2.msra.mxu0 0.0
    %837 = vmatprep.subr.mxu0 0.0
    %838 = vmatpush2.msra.mxu0 0.0
    %839 = vmatprep.subr.mxu0 0.0
    %840 = vmatpush2.msra.mxu0 0.0
    %841 = vmatprep.subr.mxu0 0.0
    %842 = vmatpush2.msra.mxu0 0.0
    %843 = vmatprep.subr.mxu0 0.0
    %844 = vmatpush2.msra.mxu0 0.0
    %845 = vmatprep.subr.mxu0 0.0
    %846 = vmatpush2.msra.mxu0 0.0
    %847 = vmatprep.subr.mxu0 0.0
    %848 = vmatpush2.msra.mxu0 0.0
    %849 = vmatprep.subr.mxu0 0.0
    %850 = vmatpush2.msra.mxu0 0.0
    %851 = vmatprep.subr.mxu0 0.0
    %852 = vmatpush2.msra.mxu0 0.0
    %853 = vmatprep.subr.mxu0 0.0
    %854 = vmatpush2.msra.mxu0 0.0
    %855 = vmatprep.subr.mxu0 0.0
    %856 = vmatpush2.msra.mxu0 0.0
    %857 = vmatprep.subr.mxu0 0.0
    %858 = vmatpush2.msra.mxu0 0.0
    %859 = vmatprep.subr.mxu0 0.0
    %860 = vmatpush2.msra.mxu0 0.0
    %861 = vmatprep.subr.mxu0 0.0
    %862 = vmatpush2.msra.mxu0 0.0
    %863 = vmatprep.mubr.f32.mxu0 0.0
    %v864 = vand.u32 %v600, 4294901760
    %v865 = vsub.f32 %v600, %v864
    %866 = vmatmul.mubr.f32.gmra.mxu0 %v865
    %v867 = vpop.f32.mrf.mxu0
    %v868 = vadd.f32 %v782, %v867
    %v869 = vpop.f32.mrf.mxu0
    %870 = vmatprep.mubr.f32.mxu0 0.0
    %v871 = vand.u32 %v603, 4294901760
    %v872 = vsub.f32 %v603, %v871
    %873 = vmatmul.mubr.f32.gmra.mxu0 %v872
    %v874 = vpop.f32.mrf.mxu0
    %v875 = vadd.f32 %v788, %v874
    %v876 = vpop.f32.mrf.mxu0
    %877 = vdwg.mxu0
    %878 = vmatprep.subr.mxu0 0.0
    %879 = vmatpush1.msra.mxu0 0.0
    %880 = vmatprep.subr.mxu0 0.0
    %881 = vmatpush1.msra.mxu0 0.0
    %882 = vmatprep.subr.mxu0 0.0
    %883 = vmatpush1.msra.mxu0 0.0
    %884 = vmatprep.subr.mxu0 0.0
    %885 = vmatpush1.msra.mxu0 0.0
    %886 = vmatprep.subr.mxu0 0.0
    %887 = vmatpush1.msra.mxu0 0.0
    %888 = vmatprep.subr.mxu0 0.0
    %889 = vmatpush1.msra.mxu0 0.0
    %890 = vmatprep.subr.mxu0 0.0
    %891 = vmatpush1.msra.mxu0 0.0
    %892 = vmatprep.subr.mxu0 0.0
    %893 = vmatpush1.msra.mxu0 0.0
    %894 = vmatprep.subr.mxu0 0.0
    %895 = vmatpush1.msra.mxu0 0.0
    %896 = vmatprep.subr.mxu0 0.0
    %897 = vmatpush1.msra.mxu0 0.0
    %898 = vmatprep.subr.mxu0 0.0
    %899 = vmatpush1.msra.mxu0 0.0
    %900 = vmatprep.subr.mxu0 0.0
    %901 = vmatpush1.msra.mxu0 0.0
    %902 = vmatprep.subr.mxu0 0.0
    %v903 = vand.u32 %v590, 4294901760
    %904 = vmatpush1.msra.mxu0 %v903
    %905 = vmatprep.subr.mxu0 0.0
    %v906 = vand.u32 %v589, 4294901760
    %907 = vmatpush1.msra.mxu0 %v906
    %908 = vmatprep.subr.mxu0 0.0
    %v909 = vand.u32 %v588, 4294901760
    %910 = vmatpush1.msra.mxu0 %v909
    %911 = vmatprep.subr.mxu0 0.0
    %v912 = vand.u32 %v587, 4294901760
    %913 = vmatpush1.msra.mxu0 %v912
    %914 = vmatprep.subr.mxu0 0.0
    %915 = vmatpush2.msra.mxu0 0.0
    %916 = vmatprep.subr.mxu0 0.0
    %917 = vmatpush2.msra.mxu0 0.0
    %918 = vmatprep.subr.mxu0 0.0
    %919 = vmatpush2.msra.mxu0 0.0
    %920 = vmatprep.subr.mxu0 0.0
    %921 = vmatpush2.msra.mxu0 0.0
    %922 = vmatprep.subr.mxu0 0.0
    %923 = vmatpush2.msra.mxu0 0.0
    %924 = vmatprep.subr.mxu0 0.0
    %925 = vmatpush2.msra.mxu0 0.0
    %926 = vmatprep.subr.mxu0 0.0
    %927 = vmatpush2.msra.mxu0 0.0
    %928 = vmatprep.subr.mxu0 0.0
    %929 = vmatpush2.msra.mxu0 0.0
    %930 = vmatprep.subr.mxu0 0.0
    %931 = vmatpush2.msra.mxu0 0.0
    %932 = vmatprep.subr.mxu0 0.0
    %933 = vmatpush2.msra.mxu0 0.0
    %934 = vmatprep.subr.mxu0 0.0
    %935 = vmatpush2.msra.mxu0 0.0
    %936 = vmatprep.subr.mxu0 0.0
    %937 = vmatpush2.msra.mxu0 0.0
    %938 = vmatprep.subr.mxu0 0.0
    %939 = vmatpush2.msra.mxu0 0.0
    %940 = vmatprep.subr.mxu0 0.0
    %941 = vmatpush2.msra.mxu0 0.0
    %942 = vmatprep.subr.mxu0 0.0
    %943 = vmatpush2.msra.mxu0 0.0
    %944 = vmatprep.subr.mxu0 0.0
    %945 = vmatpush2.msra.mxu0 0.0
    %946 = vmatprep.mubr.f32.mxu0 0.0
    %v947 = vand.u32 %v600, 4294901760
    %v948 = vsub.f32 %v600, %v947
    %v949 = vand.u32 %v948, 4294901760
    %950 = vmatmul.mubr.f32.gmra.mxu0 %v949
    %v951 = vpop.f32.mrf.mxu0
    %v952 = vadd.f32 %v868, %v951
    %v953 = vpop.f32.mrf.mxu0
    %954 = vmatprep.mubr.f32.mxu0 0.0
    %v955 = vand.u32 %v603, 4294901760
    %v956 = vsub.f32 %v603, %v955
    %v957 = vand.u32 %v956, 4294901760
    %958 = vmatmul.mubr.f32.gmra.mxu0 %v957
    %v959 = vpop.f32.mrf.mxu0
    %v960 = vadd.f32 %v875, %v959
    %v961 = vpop.f32.mrf.mxu0
    %962 = vdwg.mxu0
    %963 = vmatprep.subr.mxu0 0.0
    %964 = vmatpush1.msra.mxu0 0.0
    %965 = vmatprep.subr.mxu0 0.0
    %966 = vmatpush1.msra.mxu0 0.0
    %967 = vmatprep.subr.mxu0 0.0
    %968 = vmatpush1.msra.mxu0 0.0
    %969 = vmatprep.subr.mxu0 0.0
    %970 = vmatpush1.msra.mxu0 0.0
    %971 = vmatprep.subr.mxu0 0.0
    %972 = vmatpush1.msra.mxu0 0.0
    %973 = vmatprep.subr.mxu0 0.0
    %974 = vmatpush1.msra.mxu0 0.0
    %975 = vmatprep.subr.mxu0 0.0
    %976 = vmatpush1.msra.mxu0 0.0
    %977 = vmatprep.subr.mxu0 0.0
    %978 = vmatpush1.msra.mxu0 0.0
    %979 = vmatprep.subr.mxu0 0.0
    %980 = vmatpush1.msra.mxu0 0.0
    %981 = vmatprep.subr.mxu0 0.0
    %982 = vmatpush1.msra.mxu0 0.0
    %983 = vmatprep.subr.mxu0 0.0
    %984 = vmatpush1.msra.mxu0 0.0
    %985 = vmatprep.subr.mxu0 0.0
    %986 = vmatpush1.msra.mxu0 0.0
    %987 = vmatprep.subr.mxu0 0.0
    %v988 = vand.u32 %v590, 4294901760
    %v989 = vsub.f32 %v590, %v988
    %v990 = vand.u32 %v989, 4294901760
    %991 = vmatpush1.msra.mxu0 %v990
    %992 = vmatprep.subr.mxu0 0.0
    %v993 = vand.u32 %v589, 4294901760
    %v994 = vsub.f32 %v589, %v993
    %v995 = vand.u32 %v994, 4294901760
    %996 = vmatpush1.msra.mxu0 %v995
    %997 = vmatprep.subr.mxu0 0.0
    %v998 = vand.u32 %v588, 4294901760
    %v999 = vsub.f32 %v588, %v998
    %v1000 = vand.u32 %v999, 4294901760
    %1001 = vmatpush1.msra.mxu0 %v1000
    %1002 = vmatprep.subr.mxu0 0.0
    %v1003 = vand.u32 %v587, 4294901760
    %v1004 = vsub.f32 %v587, %v1003
    %v1005 = vand.u32 %v1004, 4294901760
    %1006 = vmatpush1.msra.mxu0 %v1005
    %1007 = vmatprep.subr.mxu0 0.0
    %1008 = vmatpush2.msra.mxu0 0.0
    %1009 = vmatprep.subr.mxu0 0.0
    %1010 = vmatpush2.msra.mxu0 0.0
    %1011 = vmatprep.subr.mxu0 0.0
    %1012 = vmatpush2.msra.mxu0 0.0
    %1013 = vmatprep.subr.mxu0 0.0
    %1014 = vmatpush2.msra.mxu0 0.0
    %1015 = vmatprep.subr.mxu0 0.0
    %1016 = vmatpush2.msra.mxu0 0.0
    %1017 = vmatprep.subr.mxu0 0.0
    %1018 = vmatpush2.msra.mxu0 0.0
    %1019 = vmatprep.subr.mxu0 0.0
    %1020 = vmatpush2.msra.mxu0 0.0
    %1021 = vmatprep.subr.mxu0 0.0
    %1022 = vmatpush2.msra.mxu0 0.0
    %1023 = vmatprep.subr.mxu0 0.0
    %1024 = vmatpush2.msra.mxu0 0.0
    %1025 = vmatprep.subr.mxu0 0.0
    %1026 = vmatpush2.msra.mxu0 0.0
    %1027 = vmatprep.subr.mxu0 0.0
    %1028 = vmatpush2.msra.mxu0 0.0
    %1029 = vmatprep.subr.mxu0 0.0
    %1030 = vmatpush2.msra.mxu0 0.0
    %1031 = vmatprep.subr.mxu0 0.0
    %1032 = vmatpush2.msra.mxu0 0.0
    %1033 = vmatprep.subr.mxu0 0.0
    %1034 = vmatpush2.msra.mxu0 0.0
    %1035 = vmatprep.subr.mxu0 0.0
    %1036 = vmatpush2.msra.mxu0 0.0
    %1037 = vmatprep.subr.mxu0 0.0
    %1038 = vmatpush2.msra.mxu0 0.0
    %1039 = vmatprep.mubr.f32.mxu0 0.0
    %v1040 = vand.u32 %v600, 4294901760
    %1041 = vmatmul.mubr.f32.gmra.mxu0 %v1040
    %v1042 = vpop.f32.mrf.mxu0
    %v1043 = vadd.f32 %v952, %v1042
    %v1044 = vpop.f32.mrf.mxu0
    %1045 = vmatprep.mubr.f32.mxu0 0.0
    %v1046 = vand.u32 %v603, 4294901760
    %1047 = vmatmul.mubr.f32.gmra.mxu0 %v1046
    %v1048 = vpop.f32.mrf.mxu0
    %v1049 = vadd.f32 %v960, %v1048
    %v1050 = vpop.f32.mrf.mxu0
    %1051 = vdwg.mxu0
    %1052 = vmatprep.subr.mxu0 0.0
    %1053 = vmatpush1.msra.mxu0 0.0
    %1054 = vmatprep.subr.mxu0 0.0
    %1055 = vmatpush1.msra.mxu0 0.0
    %1056 = vmatprep.subr.mxu0 0.0
    %1057 = vmatpush1.msra.mxu0 0.0
    %1058 = vmatprep.subr.mxu0 0.0
    %1059 = vmatpush1.msra.mxu0 0.0
    %1060 = vmatprep.subr.mxu0 0.0
    %1061 = vmatpush1.msra.mxu0 0.0
    %1062 = vmatprep.subr.mxu0 0.0
    %1063 = vmatpush1.msra.mxu0 0.0
    %1064 = vmatprep.subr.mxu0 0.0
    %1065 = vmatpush1.msra.mxu0 0.0
    %1066 = vmatprep.subr.mxu0 0.0
    %1067 = vmatpush1.msra.mxu0 0.0
    %1068 = vmatprep.subr.mxu0 0.0
    %1069 = vmatpush1.msra.mxu0 0.0
    %1070 = vmatprep.subr.mxu0 0.0
    %1071 = vmatpush1.msra.mxu0 0.0
    %1072 = vmatprep.subr.mxu0 0.0
    %1073 = vmatpush1.msra.mxu0 0.0
    %1074 = vmatprep.subr.mxu0 0.0
    %1075 = vmatpush1.msra.mxu0 0.0
    %1076 = vmatprep.subr.mxu0 0.0
    %v1077 = vand.u32 %v590, 4294901760
    %1078 = vmatpush1.msra.mxu0 %v1077
    %1079 = vmatprep.subr.mxu0 0.0
    %v1080 = vand.u32 %v589, 4294901760
    %1081 = vmatpush1.msra.mxu0 %v1080
    %1082 = vmatprep.subr.mxu0 0.0
    %v1083 = vand.u32 %v588, 4294901760
    %1084 = vmatpush1.msra.mxu0 %v1083
    %1085 = vmatprep.subr.mxu0 0.0
    %v1086 = vand.u32 %v587, 4294901760
    %1087 = vmatpush1.msra.mxu0 %v1086
    %1088 = vmatprep.subr.mxu0 0.0
    %1089 = vmatpush2.msra.mxu0 0.0
    %1090 = vmatprep.subr.mxu0 0.0
    %1091 = vmatpush2.msra.mxu0 0.0
    %1092 = vmatprep.subr.mxu0 0.0
    %1093 = vmatpush2.msra.mxu0 0.0
    %1094 = vmatprep.subr.mxu0 0.0
    %1095 = vmatpush2.msra.mxu0 0.0
    %1096 = vmatprep.subr.mxu0 0.0
    %1097 = vmatpush2.msra.mxu0 0.0
    %1098 = vmatprep.subr.mxu0 0.0
    %1099 = vmatpush2.msra.mxu0 0.0
    %1100 = vmatprep.subr.mxu0 0.0
    %1101 = vmatpush2.msra.mxu0 0.0
    %1102 = vmatprep.subr.mxu0 0.0
    %1103 = vmatpush2.msra.mxu0 0.0
    %1104 = vmatprep.subr.mxu0 0.0
    %1105 = vmatpush2.msra.mxu0 0.0
    %1106 = vmatprep.subr.mxu0 0.0
    %1107 = vmatpush2.msra.mxu0 0.0
    %1108 = vmatprep.subr.mxu0 0.0
    %1109 = vmatpush2.msra.mxu0 0.0
    %1110 = vmatprep.subr.mxu0 0.0
    %1111 = vmatpush2.msra.mxu0 0.0
    %1112 = vmatprep.subr.mxu0 0.0
    %1113 = vmatpush2.msra.mxu0 0.0
    %1114 = vmatprep.subr.mxu0 0.0
    %1115 = vmatpush2.msra.mxu0 0.0
    %1116 = vmatprep.subr.mxu0 0.0
    %1117 = vmatpush2.msra.mxu0 0.0
    %1118 = vmatprep.subr.mxu0 0.0
    %1119 = vmatpush2.msra.mxu0 0.0
    %1120 = vmatprep.mubr.f32.mxu0 0.0
    %v1121 = vand.u32 %v600, 4294901760
    %1122 = vmatmul.mubr.f32.gmra.mxu0 %v1121
    %v1123 = vpop.f32.mrf.mxu0
    %v1124 = vadd.f32 %v1043, %v1123
    %v1125 = vpop.f32.mrf.mxu0
    %1126 = vmatprep.mubr.f32.mxu0 0.0
    %v1127 = vand.u32 %v603, 4294901760
    %1128 = vmatmul.mubr.f32.gmra.mxu0 %v1127
    %v1129 = vpop.f32.mrf.mxu0
    %v1130 = vadd.f32 %v1049, %v1129
    %v1131 = vpop.f32.mrf.mxu0
    %1132 = vdwg.mxu0
    %v1133 = vmax.f32 %v1124, 0.0
    %v1134 = vmax.f32 %v1130, 0.0
    %v1135 = vld [vmem:[#allocation7] sm:$0xff]
    %v1136 = vld [vmem:[#allocation7 + $0x8] sm:$0xff]
    %v1137 = vld [vmem:[#allocation7 + $0x10] sm:$0xff]
    %v1138 = vld [vmem:[#allocation7 + $0x18] sm:$0xff]
    %v1139 = vld [vmem:[%s6] sm:$0x1]
    %v1141 = vlaneseq
    %v1142 = vshrl.u32 %v1141, 7
    %v1143 = vsub.s32 0, %v1142
    %v1144 = vrot.slane %v1139, %v1143
    %v1147 = vsel %vm598, %v1133, 0
    %v1150 = vsel %vm598, %v1134, 0
    %1152 = vmatprep.subr.mxu0 0.0
    %1153 = vmatpush1.msra.mxu0 0.0
    %1154 = vmatprep.subr.mxu0 0.0
    %1155 = vmatpush1.msra.mxu0 0.0
    %1156 = vmatprep.subr.mxu0 0.0
    %1157 = vmatpush1.msra.mxu0 0.0
    %1158 = vmatprep.subr.mxu0 0.0
    %1159 = vmatpush1.msra.mxu0 0.0
    %1160 = vmatprep.subr.mxu0 0.0
    %1161 = vmatpush1.msra.mxu0 0.0
    %1162 = vmatprep.subr.mxu0 0.0
    %1163 = vmatpush1.msra.mxu0 0.0
    %1164 = vmatprep.subr.mxu0 0.0
    %1165 = vmatpush1.msra.mxu0 0.0
    %1166 = vmatprep.subr.mxu0 0.0
    %1167 = vmatpush1.msra.mxu0 0.0
    %1168 = vmatprep.subr.mxu0 0.0
    %1169 = vmatpush1.msra.mxu0 0.0
    %1170 = vmatprep.subr.mxu0 0.0
    %1171 = vmatpush1.msra.mxu0 0.0
    %1172 = vmatprep.subr.mxu0 0.0
    %1173 = vmatpush1.msra.mxu0 0.0
    %1174 = vmatprep.subr.mxu0 0.0
    %1175 = vmatpush1.msra.mxu0 0.0
    %1176 = vmatprep.subr.mxu0 0.0
    %v1177 = vand.u32 %v1138, 4294901760
    %1178 = vmatpush1.msra.mxu0 %v1177
    %1179 = vmatprep.subr.mxu0 0.0
    %v1180 = vand.u32 %v1137, 4294901760
    %1181 = vmatpush1.msra.mxu0 %v1180
    %1182 = vmatprep.subr.mxu0 0.0
    %v1183 = vand.u32 %v1136, 4294901760
    %1184 = vmatpush1.msra.mxu0 %v1183
    %1185 = vmatprep.subr.mxu0 0.0
    %v1186 = vand.u32 %v1135, 4294901760
    %1187 = vmatpush1.msra.mxu0 %v1186
    %1188 = vmatprep.subr.mxu0 0.0
    %1189 = vmatpush2.msra.mxu0 0.0
    %1190 = vmatprep.subr.mxu0 0.0
    %1191 = vmatpush2.msra.mxu0 0.0
    %1192 = vmatprep.subr.mxu0 0.0
    %1193 = vmatpush2.msra.mxu0 0.0
    %1194 = vmatprep.subr.mxu0 0.0
    %1195 = vmatpush2.msra.mxu0 0.0
    %1196 = vmatprep.subr.mxu0 0.0
    %1197 = vmatpush2.msra.mxu0 0.0
    %1198 = vmatprep.subr.mxu0 0.0
    %1199 = vmatpush2.msra.mxu0 0.0
    %1200 = vmatprep.subr.mxu0 0.0
    %1201 = vmatpush2.msra.mxu0 0.0
    %1202 = vmatprep.subr.mxu0 0.0
    %1203 = vmatpush2.msra.mxu0 0.0
    %1204 = vmatprep.subr.mxu0 0.0
    %1205 = vmatpush2.msra.mxu0 0.0
    %1206 = vmatprep.subr.mxu0 0.0
    %1207 = vmatpush2.msra.mxu0 0.0
    %1208 = vmatprep.subr.mxu0 0.0
    %1209 = vmatpush2.msra.mxu0 0.0
    %1210 = vmatprep.subr.mxu0 0.0
    %1211 = vmatpush2.msra.mxu0 0.0
    %1212 = vmatprep.subr.mxu0 0.0
    %1213 = vmatpush2.msra.mxu0 0.0
    %1214 = vmatprep.subr.mxu0 0.0
    %1215 = vmatpush2.msra.mxu0 0.0
    %1216 = vmatprep.subr.mxu0 0.0
    %1217 = vmatpush2.msra.mxu0 0.0
    %1218 = vmatprep.subr.mxu0 0.0
    %1219 = vmatpush2.msra.mxu0 0.0
    %1220 = vmatprep.mubr.f32.mxu0 0.0
    %v1221 = vand.u32 %v1147, 4294901760
    %v1222 = vsub.f32 %v1147, %v1221
    %v1223 = vand.u32 %v1222, 4294901760
    %v1224 = vsub.f32 %v1222, %v1223
    %v1225 = vand.u32 %v1224, 4294901760
    %1226 = vmatmul.mubr.f32.gmra.mxu0 %v1225
    %v1227 = vpop.f32.mrf.mxu0
    %v1228 = vadd.f32 %v1144, %v1227
    %v1229 = vpop.f32.mrf.mxu0
    %1230 = vmatprep.mubr.f32.mxu0 0.0
    %v1231 = vand.u32 %v1150, 4294901760
    %v1232 = vsub.f32 %v1150, %v1231
    %v1233 = vand.u32 %v1232, 4294901760
    %v1234 = vsub.f32 %v1232, %v1233
    %v1235 = vand.u32 %v1234, 4294901760
    %1236 = vmatmul.mubr.f32.gmra.mxu0 %v1235
    %v1237 = vpop.f32.mrf.mxu0
    %v1238 = vadd.f32 %v1144, %v1237
    %v1239 = vpop.f32.mrf.mxu0
    %1240 = vdwg.mxu0
    %1241 = vmatprep.subr.mxu0 0.0
    %1242 = vmatpush1.msra.mxu0 0.0
    %1243 = vmatprep.subr.mxu0 0.0
    %1244 = vmatpush1.msra.mxu0 0.0
    %1245 = vmatprep.subr.mxu0 0.0
    %1246 = vmatpush1.msra.mxu0 0.0
    %1247 = vmatprep.subr.mxu0 0.0
    %1248 = vmatpush1.msra.mxu0 0.0
    %1249 = vmatprep.subr.mxu0 0.0
    %1250 = vmatpush1.msra.mxu0 0.0
    %1251 = vmatprep.subr.mxu0 0.0
    %1252 = vmatpush1.msra.mxu0 0.0
    %1253 = vmatprep.subr.mxu0 0.0
    %1254 = vmatpush1.msra.mxu0 0.0
    %1255 = vmatprep.subr.mxu0 0.0
    %1256 = vmatpush1.msra.mxu0 0.0
    %1257 = vmatprep.subr.mxu0 0.0
    %1258 = vmatpush1.msra.mxu0 0.0
    %1259 = vmatprep.subr.mxu0 0.0
    %1260 = vmatpush1.msra.mxu0 0.0
    %1261 = vmatprep.subr.mxu0 0.0
    %1262 = vmatpush1.msra.mxu0 0.0
    %1263 = vmatprep.subr.mxu0 0.0
    %1264 = vmatpush1.msra.mxu0 0.0
    %1265 = vmatprep.subr.mxu0 0.0
    %v1266 = vand.u32 %v1138, 4294901760
    %v1267 = vsub.f32 %v1138, %v1266
    %v1268 = vand.u32 %v1267, 4294901760
    %v1269 = vsub.f32 %v1267, %v1268
    %v1270 = vand.u32 %v1269, 4294901760
    %1271 = vmatpush1.msra.mxu0 %v1270
    %1272 = vmatprep.subr.mxu0 0.0
    %v1273 = vand.u32 %v1137, 4294901760
    %v1274 = vsub.f32 %v1137, %v1273
    %v1275 = vand.u32 %v1274, 4294901760
    %v1276 = vsub.f32 %v1274, %v1275
    %v1277 = vand.u32 %v1276, 4294901760
    %1278 = vmatpush1.msra.mxu0 %v1277
    %1279 = vmatprep.subr.mxu0 0.0
    %v1280 = vand.u32 %v1136, 4294901760
    %v1281 = vsub.f32 %v1136, %v1280
    %v1282 = vand.u32 %v1281, 4294901760
    %v1283 = vsub.f32 %v1281, %v1282
    %v1284 = vand.u32 %v1283, 4294901760
    %1285 = vmatpush1.msra.mxu0 %v1284
    %1286 = vmatprep.subr.mxu0 0.0
    %v1287 = vand.u32 %v1135, 4294901760
    %v1288 = vsub.f32 %v1135, %v1287
    %v1289 = vand.u32 %v1288, 4294901760
    %v1290 = vsub.f32 %v1288, %v1289
    %v1291 = vand.u32 %v1290, 4294901760
    %1292 = vmatpush1.msra.mxu0 %v1291
    %1293 = vmatprep.subr.mxu0 0.0
    %1294 = vmatpush2.msra.mxu0 0.0
    %1295 = vmatprep.subr.mxu0 0.0
    %1296 = vmatpush2.msra.mxu0 0.0
    %1297 = vmatprep.subr.mxu0 0.0
    %1298 = vmatpush2.msra.mxu0 0.0
    %1299 = vmatprep.subr.mxu0 0.0
    %1300 = vmatpush2.msra.mxu0 0.0
    %1301 = vmatprep.subr.mxu0 0.0
    %1302 = vmatpush2.msra.mxu0 0.0
    %1303 = vmatprep.subr.mxu0 0.0
    %1304 = vmatpush2.msra.mxu0 0.0
    %1305 = vmatprep.subr.mxu0 0.0
    %1306 = vmatpush2.msra.mxu0 0.0
    %1307 = vmatprep.subr.mxu0 0.0
    %1308 = vmatpush2.msra.mxu0 0.0
    %1309 = vmatprep.subr.mxu0 0.0
    %1310 = vmatpush2.msra.mxu0 0.0
    %1311 = vmatprep.subr.mxu0 0.0
    %1312 = vmatpush2.msra.mxu0 0.0
    %1313 = vmatprep.subr.mxu0 0.0
    %1314 = vmatpush2.msra.mxu0 0.0
    %1315 = vmatprep.subr.mxu0 0.0
    %1316 = vmatpush2.msra.mxu0 0.0
    %1317 = vmatprep.subr.mxu0 0.0
    %1318 = vmatpush2.msra.mxu0 0.0
    %1319 = vmatprep.subr.mxu0 0.0
    %1320 = vmatpush2.msra.mxu0 0.0
    %1321 = vmatprep.subr.mxu0 0.0
    %1322 = vmatpush2.msra.mxu0 0.0
    %1323 = vmatprep.subr.mxu0 0.0
    %1324 = vmatpush2.msra.mxu0 0.0
    %1325 = vmatprep.mubr.f32.mxu0 0.0
    %v1326 = vand.u32 %v1147, 4294901760
    %1327 = vmatmul.mubr.f32.gmra.mxu0 %v1326
    %v1328 = vpop.f32.mrf.mxu0
    %v1329 = vadd.f32 %v1228, %v1328
    %v1330 = vpop.f32.mrf.mxu0
    %1331 = vmatprep.mubr.f32.mxu0 0.0
    %v1332 = vand.u32 %v1150, 4294901760
    %1333 = vmatmul.mubr.f32.gmra.mxu0 %v1332
    %v1334 = vpop.f32.mrf.mxu0
    %v1335 = vadd.f32 %v1238, %v1334
    %v1336 = vpop.f32.mrf.mxu0
    %1337 = vdwg.mxu0
    %1338 = vmatprep.subr.mxu0 0.0
    %1339 = vmatpush1.msra.mxu0 0.0
    %1340 = vmatprep.subr.mxu0 0.0
    %1341 = vmatpush1.msra.mxu0 0.0
    %1342 = vmatprep.subr.mxu0 0.0
    %1343 = vmatpush1.msra.mxu0 0.0
    %1344 = vmatprep.subr.mxu0 0.0
    %1345 = vmatpush1.msra.mxu0 0.0
    %1346 = vmatprep.subr.mxu0 0.0
    %1347 = vmatpush1.msra.mxu0 0.0
    %1348 = vmatprep.subr.mxu0 0.0
    %1349 = vmatpush1.msra.mxu0 0.0
    %1350 = vmatprep.subr.mxu0 0.0
    %1351 = vmatpush1.msra.mxu0 0.0
    %1352 = vmatprep.subr.mxu0 0.0
    %1353 = vmatpush1.msra.mxu0 0.0
    %1354 = vmatprep.subr.mxu0 0.0
    %1355 = vmatpush1.msra.mxu0 0.0
    %1356 = vmatprep.subr.mxu0 0.0
    %1357 = vmatpush1.msra.mxu0 0.0
    %1358 = vmatprep.subr.mxu0 0.0
    %1359 = vmatpush1.msra.mxu0 0.0
    %1360 = vmatprep.subr.mxu0 0.0
    %1361 = vmatpush1.msra.mxu0 0.0
    %1362 = vmatprep.subr.mxu0 0.0
    %v1363 = vand.u32 %v1138, 4294901760
    %v1364 = vsub.f32 %v1138, %v1363
    %1365 = vmatpush1.msra.mxu0 %v1364
    %1366 = vmatprep.subr.mxu0 0.0
    %v1367 = vand.u32 %v1137, 4294901760
    %v1368 = vsub.f32 %v1137, %v1367
    %1369 = vmatpush1.msra.mxu0 %v1368
    %1370 = vmatprep.subr.mxu0 0.0
    %v1371 = vand.u32 %v1136, 4294901760
    %v1372 = vsub.f32 %v1136, %v1371
    %1373 = vmatpush1.msra.mxu0 %v1372
    %1374 = vmatprep.subr.mxu0 0.0
    %v1375 = vand.u32 %v1135, 4294901760
    %v1376 = vsub.f32 %v1135, %v1375
    %1377 = vmatpush1.msra.mxu0 %v1376
    %1378 = vmatprep.subr.mxu0 0.0
    %1379 = vmatpush2.msra.mxu0 0.0
    %1380 = vmatprep.subr.mxu0 0.0
    %1381 = vmatpush2.msra.mxu0 0.0
    %1382 = vmatprep.subr.mxu0 0.0
    %1383 = vmatpush2.msra.mxu0 0.0
    %1384 = vmatprep.subr.mxu0 0.0
    %1385 = vmatpush2.msra.mxu0 0.0
    %1386 = vmatprep.subr.mxu0 0.0
    %1387 = vmatpush2.msra.mxu0 0.0
    %1388 = vmatprep.subr.mxu0 0.0
    %1389 = vmatpush2.msra.mxu0 0.0
    %1390 = vmatprep.subr.mxu0 0.0
    %1391 = vmatpush2.msra.mxu0 0.0
    %1392 = vmatprep.subr.mxu0 0.0
    %1393 = vmatpush2.msra.mxu0 0.0
    %1394 = vmatprep.subr.mxu0 0.0
    %1395 = vmatpush2.msra.mxu0 0.0
    %1396 = vmatprep.subr.mxu0 0.0
    %1397 = vmatpush2.msra.mxu0 0.0
    %1398 = vmatprep.subr.mxu0 0.0
    %1399 = vmatpush2.msra.mxu0 0.0
    %1400 = vmatprep.subr.mxu0 0.0
    %1401 = vmatpush2.msra.mxu0 0.0
    %1402 = vmatprep.subr.mxu0 0.0
    %1403 = vmatpush2.msra.mxu0 0.0
    %1404 = vmatprep.subr.mxu0 0.0
    %1405 = vmatpush2.msra.mxu0 0.0
    %1406 = vmatprep.subr.mxu0 0.0
    %1407 = vmatpush2.msra.mxu0 0.0
    %1408 = vmatprep.subr.mxu0 0.0
    %1409 = vmatpush2.msra.mxu0 0.0
    %1410 = vmatprep.mubr.f32.mxu0 0.0
    %v1411 = vand.u32 %v1147, 4294901760
    %v1412 = vsub.f32 %v1147, %v1411
    %1413 = vmatmul.mubr.f32.gmra.mxu0 %v1412
    %v1414 = vpop.f32.mrf.mxu0
    %v1415 = vadd.f32 %v1329, %v1414
    %v1416 = vpop.f32.mrf.mxu0
    %1417 = vmatprep.mubr.f32.mxu0 0.0
    %v1418 = vand.u32 %v1150, 4294901760
    %v1419 = vsub.f32 %v1150, %v1418
    %1420 = vmatmul.mubr.f32.gmra.mxu0 %v1419
    %v1421 = vpop.f32.mrf.mxu0
    %v1422 = vadd.f32 %v1335, %v1421
    %v1423 = vpop.f32.mrf.mxu0
    %1424 = vdwg.mxu0
    %1425 = vmatprep.subr.mxu0 0.0
    %1426 = vmatpush1.msra.mxu0 0.0
    %1427 = vmatprep.subr.mxu0 0.0
    %1428 = vmatpush1.msra.mxu0 0.0
    %1429 = vmatprep.subr.mxu0 0.0
    %1430 = vmatpush1.msra.mxu0 0.0
    %1431 = vmatprep.subr.mxu0 0.0
    %1432 = vmatpush1.msra.mxu0 0.0
    %1433 = vmatprep.subr.mxu0 0.0
    %1434 = vmatpush1.msra.mxu0 0.0
    %1435 = vmatprep.subr.mxu0 0.0
    %1436 = vmatpush1.msra.mxu0 0.0
    %1437 = vmatprep.subr.mxu0 0.0
    %1438 = vmatpush1.msra.mxu0 0.0
    %1439 = vmatprep.subr.mxu0 0.0
    %1440 = vmatpush1.msra.mxu0 0.0
    %1441 = vmatprep.subr.mxu0 0.0
    %1442 = vmatpush1.msra.mxu0 0.0
    %1443 = vmatprep.subr.mxu0 0.0
    %1444 = vmatpush1.msra.mxu0 0.0
    %1445 = vmatprep.subr.mxu0 0.0
    %1446 = vmatpush1.msra.mxu0 0.0
    %1447 = vmatprep.subr.mxu0 0.0
    %1448 = vmatpush1.msra.mxu0 0.0
    %1449 = vmatprep.subr.mxu0 0.0
    %v1450 = vand.u32 %v1138, 4294901760
    %1451 = vmatpush1.msra.mxu0 %v1450
    %1452 = vmatprep.subr.mxu0 0.0
    %v1453 = vand.u32 %v1137, 4294901760
    %1454 = vmatpush1.msra.mxu0 %v1453
    %1455 = vmatprep.subr.mxu0 0.0
    %v1456 = vand.u32 %v1136, 4294901760
    %1457 = vmatpush1.msra.mxu0 %v1456
    %1458 = vmatprep.subr.mxu0 0.0
    %v1459 = vand.u32 %v1135, 4294901760
    %1460 = vmatpush1.msra.mxu0 %v1459
    %1461 = vmatprep.subr.mxu0 0.0
    %1462 = vmatpush2.msra.mxu0 0.0
    %1463 = vmatprep.subr.mxu0 0.0
    %1464 = vmatpush2.msra.mxu0 0.0
    %1465 = vmatprep.subr.mxu0 0.0
    %1466 = vmatpush2.msra.mxu0 0.0
    %1467 = vmatprep.subr.mxu0 0.0
    %1468 = vmatpush2.msra.mxu0 0.0
    %1469 = vmatprep.subr.mxu0 0.0
    %1470 = vmatpush2.msra.mxu0 0.0
    %1471 = vmatprep.subr.mxu0 0.0
    %1472 = vmatpush2.msra.mxu0 0.0
    %1473 = vmatprep.subr.mxu0 0.0
    %1474 = vmatpush2.msra.mxu0 0.0
    %1475 = vmatprep.subr.mxu0 0.0
    %1476 = vmatpush2.msra.mxu0 0.0
    %1477 = vmatprep.subr.mxu0 0.0
    %1478 = vmatpush2.msra.mxu0 0.0
    %1479 = vmatprep.subr.mxu0 0.0
    %1480 = vmatpush2.msra.mxu0 0.0
    %1481 = vmatprep.subr.mxu0 0.0
    %1482 = vmatpush2.msra.mxu0 0.0
    %1483 = vmatprep.subr.mxu0 0.0
    %1484 = vmatpush2.msra.mxu0 0.0
    %1485 = vmatprep.subr.mxu0 0.0
    %1486 = vmatpush2.msra.mxu0 0.0
    %1487 = vmatprep.subr.mxu0 0.0
    %1488 = vmatpush2.msra.mxu0 0.0
    %1489 = vmatprep.subr.mxu0 0.0
    %1490 = vmatpush2.msra.mxu0 0.0
    %1491 = vmatprep.subr.mxu0 0.0
    %1492 = vmatpush2.msra.mxu0 0.0
    %1493 = vmatprep.mubr.f32.mxu0 0.0
    %v1494 = vand.u32 %v1147, 4294901760
    %v1495 = vsub.f32 %v1147, %v1494
    %v1496 = vand.u32 %v1495, 4294901760
    %1497 = vmatmul.mubr.f32.gmra.mxu0 %v1496
    %v1498 = vpop.f32.mrf.mxu0
    %v1499 = vadd.f32 %v1415, %v1498
    %v1500 = vpop.f32.mrf.mxu0
    %1501 = vmatprep.mubr.f32.mxu0 0.0
    %v1502 = vand.u32 %v1150, 4294901760
    %v1503 = vsub.f32 %v1150, %v1502
    %v1504 = vand.u32 %v1503, 4294901760
    %1505 = vmatmul.mubr.f32.gmra.mxu0 %v1504
    %v1506 = vpop.f32.mrf.mxu0
    %v1507 = vadd.f32 %v1422, %v1506
    %v1508 = vpop.f32.mrf.mxu0
    %1509 = vdwg.mxu0
    %1510 = vmatprep.subr.mxu0 0.0
    %1511 = vmatpush1.msra.mxu0 0.0
    %1512 = vmatprep.subr.mxu0 0.0
    %1513 = vmatpush1.msra.mxu0 0.0
    %1514 = vmatprep.subr.mxu0 0.0
    %1515 = vmatpush1.msra.mxu0 0.0
    %1516 = vmatprep.subr.mxu0 0.0
    %1517 = vmatpush1.msra.mxu0 0.0
    %1518 = vmatprep.subr.mxu0 0.0
    %1519 = vmatpush1.msra.mxu0 0.0
    %1520 = vmatprep.subr.mxu0 0.0
    %1521 = vmatpush1.msra.mxu0 0.0
    %1522 = vmatprep.subr.mxu0 0.0
    %1523 = vmatpush1.msra.mxu0 0.0
    %1524 = vmatprep.subr.mxu0 0.0
    %1525 = vmatpush1.msra.mxu0 0.0
    %1526 = vmatprep.subr.mxu0 0.0
    %1527 = vmatpush1.msra.mxu0 0.0
    %1528 = vmatprep.subr.mxu0 0.0
    %1529 = vmatpush1.msra.mxu0 0.0
    %1530 = vmatprep.subr.mxu0 0.0
    %1531 = vmatpush1.msra.mxu0 0.0
    %1532 = vmatprep.subr.mxu0 0.0
    %1533 = vmatpush1.msra.mxu0 0.0
    %1534 = vmatprep.subr.mxu0 0.0
    %v1535 = vand.u32 %v1138, 4294901760
    %v1536 = vsub.f32 %v1138, %v1535
    %v1537 = vand.u32 %v1536, 4294901760
    %1538 = vmatpush1.msra.mxu0 %v1537
    %1539 = vmatprep.subr.mxu0 0.0
    %v1540 = vand.u32 %v1137, 4294901760
    %v1541 = vsub.f32 %v1137, %v1540
    %v1542 = vand.u32 %v1541, 4294901760
    %1543 = vmatpush1.msra.mxu0 %v1542
    %1544 = vmatprep.subr.mxu0 0.0
    %v1545 = vand.u32 %v1136, 4294901760
    %v1546 = vsub.f32 %v1136, %v1545
    %v1547 = vand.u32 %v1546, 4294901760
    %1548 = vmatpush1.msra.mxu0 %v1547
    %1549 = vmatprep.subr.mxu0 0.0
    %v1550 = vand.u32 %v1135, 4294901760
    %v1551 = vsub.f32 %v1135, %v1550
    %v1552 = vand.u32 %v1551, 4294901760
    %1553 = vmatpush1.msra.mxu0 %v1552
    %1554 = vmatprep.subr.mxu0 0.0
    %1555 = vmatpush2.msra.mxu0 0.0
    %1556 = vmatprep.subr.mxu0 0.0
    %1557 = vmatpush2.msra.mxu0 0.0
    %1558 = vmatprep.subr.mxu0 0.0
    %1559 = vmatpush2.msra.mxu0 0.0
    %1560 = vmatprep.subr.mxu0 0.0
    %1561 = vmatpush2.msra.mxu0 0.0
    %1562 = vmatprep.subr.mxu0 0.0
    %1563 = vmatpush2.msra.mxu0 0.0
    %1564 = vmatprep.subr.mxu0 0.0
    %1565 = vmatpush2.msra.mxu0 0.0
    %1566 = vmatprep.subr.mxu0 0.0
    %1567 = vmatpush2.msra.mxu0 0.0
    %1568 = vmatprep.subr.mxu0 0.0
    %1569 = vmatpush2.msra.mxu0 0.0
    %1570 = vmatprep.subr.mxu0 0.0
    %1571 = vmatpush2.msra.mxu0 0.0
    %1572 = vmatprep.subr.mxu0 0.0
    %1573 = vmatpush2.msra.mxu0 0.0
    %1574 = vmatprep.subr.mxu0 0.0
    %1575 = vmatpush2.msra.mxu0 0.0
    %1576 = vmatprep.subr.mxu0 0.0
    %1577 = vmatpush2.msra.mxu0 0.0
    %1578 = vmatprep.subr.mxu0 0.0
    %1579 = vmatpush2.msra.mxu0 0.0
    %1580 = vmatprep.subr.mxu0 0.0
    %1581 = vmatpush2.msra.mxu0 0.0
    %1582 = vmatprep.subr.mxu0 0.0
    %1583 = vmatpush2.msra.mxu0 0.0
    %1584 = vmatprep.subr.mxu0 0.0
    %1585 = vmatpush2.msra.mxu0 0.0
    %1586 = vmatprep.mubr.f32.mxu0 0.0
    %v1587 = vand.u32 %v1147, 4294901760
    %1588 = vmatmul.mubr.f32.gmra.mxu0 %v1587
    %v1589 = vpop.f32.mrf.mxu0
    %v1590 = vadd.f32 %v1499, %v1589
    %v1591 = vpop.f32.mrf.mxu0
    %1592 = vmatprep.mubr.f32.mxu0 0.0
    %v1593 = vand.u32 %v1150, 4294901760
    %1594 = vmatmul.mubr.f32.gmra.mxu0 %v1593
    %v1595 = vpop.f32.mrf.mxu0
    %v1596 = vadd.f32 %v1507, %v1595
    %v1597 = vpop.f32.mrf.mxu0
    %1598 = vdwg.mxu0
    %1599 = vmatprep.subr.mxu0 0.0
    %1600 = vmatpush1.msra.mxu0 0.0
    %1601 = vmatprep.subr.mxu0 0.0
    %1602 = vmatpush1.msra.mxu0 0.0
    %1603 = vmatprep.subr.mxu0 0.0
    %1604 = vmatpush1.msra.mxu0 0.0
    %1605 = vmatprep.subr.mxu0 0.0
    %1606 = vmatpush1.msra.mxu0 0.0
    %1607 = vmatprep.subr.mxu0 0.0
    %1608 = vmatpush1.msra.mxu0 0.0
    %1609 = vmatprep.subr.mxu0 0.0
    %1610 = vmatpush1.msra.mxu0 0.0
    %1611 = vmatprep.subr.mxu0 0.0
    %1612 = vmatpush1.msra.mxu0 0.0
    %1613 = vmatprep.subr.mxu0 0.0
    %1614 = vmatpush1.msra.mxu0 0.0
    %1615 = vmatprep.subr.mxu0 0.0
    %1616 = vmatpush1.msra.mxu0 0.0
    %1617 = vmatprep.subr.mxu0 0.0
    %1618 = vmatpush1.msra.mxu0 0.0
    %1619 = vmatprep.subr.mxu0 0.0
    %1620 = vmatpush1.msra.mxu0 0.0
    %1621 = vmatprep.subr.mxu0 0.0
    %1622 = vmatpush1.msra.mxu0 0.0
    %1623 = vmatprep.subr.mxu0 0.0
    %v1624 = vand.u32 %v1138, 4294901760
    %1625 = vmatpush1.msra.mxu0 %v1624
    %1626 = vmatprep.subr.mxu0 0.0
    %v1627 = vand.u32 %v1137, 4294901760
    %1628 = vmatpush1.msra.mxu0 %v1627
    %1629 = vmatprep.subr.mxu0 0.0
    %v1630 = vand.u32 %v1136, 4294901760
    %1631 = vmatpush1.msra.mxu0 %v1630
    %1632 = vmatprep.subr.mxu0 0.0
    %v1633 = vand.u32 %v1135, 4294901760
    %1634 = vmatpush1.msra.mxu0 %v1633
    %1635 = vmatprep.subr.mxu0 0.0
    %1636 = vmatpush2.msra.mxu0 0.0
    %1637 = vmatprep.subr.mxu0 0.0
    %1638 = vmatpush2.msra.mxu0 0.0
    %1639 = vmatprep.subr.mxu0 0.0
    %1640 = vmatpush2.msra.mxu0 0.0
    %1641 = vmatprep.subr.mxu0 0.0
    %1642 = vmatpush2.msra.mxu0 0.0
    %1643 = vmatprep.subr.mxu0 0.0
    %1644 = vmatpush2.msra.mxu0 0.0
    %1645 = vmatprep.subr.mxu0 0.0
    %1646 = vmatpush2.msra.mxu0 0.0
    %1647 = vmatprep.subr.mxu0 0.0
    %1648 = vmatpush2.msra.mxu0 0.0
    %1649 = vmatprep.subr.mxu0 0.0
    %1650 = vmatpush2.msra.mxu0 0.0
    %1651 = vmatprep.subr.mxu0 0.0
    %1652 = vmatpush2.msra.mxu0 0.0
    %1653 = vmatprep.subr.mxu0 0.0
    %1654 = vmatpush2.msra.mxu0 0.0
    %1655 = vmatprep.subr.mxu0 0.0
    %1656 = vmatpush2.msra.mxu0 0.0
    %1657 = vmatprep.subr.mxu0 0.0
    %1658 = vmatpush2.msra.mxu0 0.0
    %1659 = vmatprep.subr.mxu0 0.0
    %1660 = vmatpush2.msra.mxu0 0.0
    %1661 = vmatprep.subr.mxu0 0.0
    %1662 = vmatpush2.msra.mxu0 0.0
    %1663 = vmatprep.subr.mxu0 0.0
    %1664 = vmatpush2.msra.mxu0 0.0
    %1665 = vmatprep.subr.mxu0 0.0
    %1666 = vmatpush2.msra.mxu0 0.0
    %1667 = vmatprep.mubr.f32.mxu0 0.0
    %v1668 = vand.u32 %v1147, 4294901760
    %1669 = vmatmul.mubr.f32.gmra.mxu0 %v1668
    %v1670 = vpop.f32.mrf.mxu0
    %v1671 = vadd.f32 %v1590, %v1670
    %v1672 = vpop.f32.mrf.mxu0
    %1673 = vmatprep.mubr.f32.mxu0 0.0
    %v1674 = vand.u32 %v1150, 4294901760
    %1675 = vmatmul.mubr.f32.gmra.mxu0 %v1674
    %v1676 = vpop.f32.mrf.mxu0
    %v1677 = vadd.f32 %v1596, %v1676
    %v1678 = vpop.f32.mrf.mxu0
    %1679 = vdwg.mxu0
    %v1680 = vlaneseq
    %v1681 = vand.u32 %v1680, 127
    %vm1682 = vcmp.lt.s32.totalorder %v1681, 4
    %vm1683 = vcmp.eq.s32.totalorder %v1681, 4
    %v1684 = vsel %vm1682, %v1671, -1e+30
    %v1685 = vsel %vm1682, %v1677, -1e+30
    %1686 = vmax.xlane.f32.xlu0 %v1684
    %v1687 = vpop.xlane.xlu0 %1686
    %1688 = vmax.xlane.f32.xlu0 %v1685
    %v1689 = vpop.xlane.xlu0 %1688
    %v1690 = vsub.f32 %v1684, %v1687
    %v1691 = vsub.f32 %v1685, %v1689
    %v1692 = vmul.f32 %v1690, 1.442695
    %v1693 = vpow.pop %v1692
    %v1694 = vmul.f32 %v1691, 1.442695
    %v1695 = vpow.pop %v1694
    %1696 = vadd.xlane.f32.xlu0 %v1693
    %v1697 = vpop.xlane.xlu0 %1696
    %1698 = vadd.xlane.f32.xlu0 %v1695
    %v1699 = vpop.xlane.xlu0 %1698
    %v1700 = vrcp.pop %v1697
    %v1701 = vmul.f32 %v1693, %v1700
    %v1702 = vrcp.pop %v1699
    %v1703 = vmul.f32 %v1695, %v1702
    %v1704 = vsel %vm1683, %v1671, 0.0
    %v1705 = vsel %vm1683, %v1677, 0.0
    %v1706 = vsel %vm1682, %v1701, %v1704
    %v1707 = vsel %vm1682, %v1703, %v1705
    %v1708 = vpack.c.bf16 %v1707, %v1706
    %v1710 = vunpack.c.l.b16 %v1708
    %v1711 = vunpack.c.h.b16 %v1708
    %v1712 = vpack.c.b16 %v1710, %v1710
    %v1713 = vpack.c.b16 %v1711, %v1711
    %1716 = vst [vmem:[#allocation9] sm:$0xf] %v1712
    %1717 = vst [vmem:[#allocation9 + $0x4] sm:$0xf] %v1713
    // Predicated region
    $region46: #{actor_critic_forward.1} parent=1 // pred_check
      _
    $region47: #{actor_critic_forward.1} parent=1 // pred_check_branch
      %1719 = sbr.rel (0) target = $region49
    $region48: #{actor_critic_forward.1} parent=1 // pred_region
      // Predicated region
      $region50: #{actor_critic_forward.1} parent=48 // pred_check
        _
      $region51: #{actor_critic_forward.1} parent=48 // pred_check_branch
        %1721 = sbr.rel (0) target = $region53
      $region52: #{actor_critic_forward.1} parent=48 // pred_region
        // Predicated region
        $region54: #{actor_critic_forward.1} parent=52 // pred_check
          _
        $region55: #{actor_critic_forward.1} parent=52 // pred_check_branch
          %1723 = sbr.rel target = $region57
        $region56: #{actor_critic_forward.1} parent=52 // pred_region
          // Predicated region
          $region69: #{actor_critic_forward.1} parent=56 // pred_check
            _
          $region70: #{actor_critic_forward.1} parent=56 // pred_check_branch
            %1739 = sbr.rel (0) target = $region72
          $region71: #{actor_critic_forward.1} parent=56 // pred_region
            %s1741 = ssub.s32 16, 1
            loop: start=0, step=1, limit=1
            $region73: #{actor_critic_forward.1} parent=71 // loop_pre_header
              _
            $region74: #{actor_critic_forward.1} parent=71 // loop_header
              %s1743 = sphi 0, %s1747
              %p1744 = scmp.ge.s32.totalorder %s1743, 1
              %s1748 = sphi [#allocation9], [#allocation9]
              %s1749 = sphi %s7, %s7
            $region75: #{actor_critic_forward.1} parent=71 // loop_header_branch
              %1746 = sbr.rel (%p1744) target = $region79
            $region76: #{actor_critic_forward.1} parent=71 // loop_body
              %v1750 = vld [vmem:[%s1748] sm:%s1741]
              %1751 = vst [vmem:[%s1749] sm:%s1741] %v1750
            $region77: #{actor_critic_forward.1} parent=71 // loop_footer
              %s1747 = sadd.s32 1, %s1743
            $region78: #{actor_critic_forward.1} parent=71 // loop_footer_branch
              %1742 = sbr.rel target = $region74
            $region79: #{actor_critic_forward.1} parent=71 // loop_exit
              _
          $region72: #{actor_critic_forward.1} parent=56 // pred_fallthru
            _
        $region57: #{actor_critic_forward.1} parent=52 // pred_fallthru
          _
        // Predicated region
        $region58: #{actor_critic_forward.1} parent=52 // pred_check
          _
        $region59: #{actor_critic_forward.1} parent=52 // pred_check_branch
          %1725 = sbr.rel (0) target = $region61
        $region60: #{actor_critic_forward.1} parent=52 // pred_region
          %s1727 = ssub.s32 16, 1
          loop: start=0, step=1, limit=1
          $region62: #{actor_critic_forward.1} parent=60 // loop_pre_header
            _
          $region63: #{actor_critic_forward.1} parent=60 // loop_header
            %s1729 = sphi 0, %s1733
            %p1730 = scmp.ge.s32.totalorder %s1729, 1
            %s1734 = sphi [#allocation9], [#allocation9]
            %s1735 = sphi %s7, %s7
          $region64: #{actor_critic_forward.1} parent=60 // loop_header_branch
            %1732 = sbr.rel (%p1730) target = $region68
          $region65: #{actor_critic_forward.1} parent=60 // loop_body
            %v1736 = vld [vmem:[%s1734] sm:%s1727]
            %1737 = vst [vmem:[%s1735] sm:%s1727] %v1736
          $region66: #{actor_critic_forward.1} parent=60 // loop_footer
            %s1733 = sadd.s32 1, %s1729
          $region67: #{actor_critic_forward.1} parent=60 // loop_footer_branch
            %1728 = sbr.rel target = $region63
          $region68: #{actor_critic_forward.1} parent=60 // loop_exit
            _
        $region61: #{actor_critic_forward.1} parent=52 // pred_fallthru
          _
      $region53: #{actor_critic_forward.1} parent=48 // pred_fallthru
        _
      %1752 = vnop
    $region49: #{actor_critic_forward.1} parent=1 // pred_fallthru
      _
    // Predicated region
    $region80: #{actor_critic_forward.1} parent=1 // pred_check
      _
    $region81: #{actor_critic_forward.1} parent=1 // pred_check_branch
      %1754 = sbr.rel (0) target = $region83
    $region82: #{actor_critic_forward.1} parent=1 // pred_region
      _
    $region83: #{actor_critic_forward.1} parent=1 // pred_fallthru
      _
    %1755 = vsyncpa [#allocation3], 1
    %1756 = vsyncpa [#allocation5], 1
    %1757 = vsyncpa [#allocation8], 1

</llo_original>
